<compile_context>
chip_gen: v7x
topology: tpu7x:2x2x1
jax: 0.10.0
libtpu: 0.0.40
codegen_flags: <defaults>
</compile_context>

<pallas_src>
import functools

import jax
import jax.numpy as jnp
from jax.experimental import pallas as pl
from jax.experimental.pallas import tpu as pltpu


# ----------------------------- configuration ------------------------------ #
STATE_SHAPE = 32      # args.state_shape (== args.platoon_state_shape)
N_AGENTS = 8          # args.n_agents
QMIX_HIDDEN = 32      # args.qmix_hidden_dim
EPISODE_NUM = 2
T_STEPS = 8           # timesteps per episode

HP = 128              # each logical 32-wide segment padded to one vreg of lanes
LANES = 128           # input lanes per sample (one vreg)
TB_MAX = 1024         # max batch rows per grid step

# input-lane layout
Q_OFF = 0                      # lanes [0, 8): per-agent q values
S_OFF = N_AGENTS               # lanes [8, 40): state
ONE_LANE = LANES - 1           # lane 127: constant 1.0 (carries all biases)

# column segments of the fused MXU output (all 128-lane aligned)
QREP_OFF = 0                           # q expanded per agent (via 0/1 E block)
W1_OFF = N_AGENTS * HP                 # hyper_w1 per-agent segments
B1_OFF = 2 * N_AGENTS * HP             # hyper_b1
W2_OFF = B1_OFF + HP                   # hyper_w2
B2H_OFF = B1_OFF + 2 * HP              # hyper_b2 first layer (pre-ReLU)
NCAT = (2 * N_AGENTS + 3) * HP         # 2432 output columns


def _round_up(x, m):
    return (x + m - 1) // m * m


# --------------------------------- kernel --------------------------------- #
def qmix_mixer_kernel(
    xin_ref,      # (TB, 128)        [q | state | 0 | 1.0] per row
    wbig_ref,     # (128, NCAT)      fused: E block + hypernet weights + biases
    w2b_ref,      # (1, HP)          hyper_b2 second-layer row (+ bb2b at lane H)
    out_ref,      # (TB, 1)          per-row q_total
    *,
    n_agents,
    hp,
):
    # Single fused MXU matmul produces: q expanded per agent, |.|-pending w1,
    # b1, w2 and the pre-ReLU hyper_b2 hidden -- all biases already included
    # via the constant-1.0 input lane.
    full = jnp.dot(xin_ref[...], wbig_ref[...],
                   preferred_element_type=jnp.float32)       # (TB, NCAT)

    nw = n_agents * hp

    # Mixing layer 1, fused: accumulate one aligned 128-lane segment at a time
    # (no (TB, n*HP) w1 / prod intermediates).
    acc = full[:, B1_OFF:B1_OFF + hp]                         # b1 segment
    for a in range(n_agents):
        q_a = full[:, QREP_OFF + a * hp:QREP_OFF + (a + 1) * hp]
        w1_a = jnp.abs(full[:, W1_OFF + a * hp:W1_OFF + (a + 1) * hp])
        acc = acc + q_a * w1_a

    # ELU(alpha=1).  exp runs on every lane (clamped input) but uses the idle
    # EUP slot; padded lanes stay exactly 0.
    hidden = jnp.where(acc > 0, acc, jnp.exp(jnp.minimum(acc, 0.0)) - 1.0)

    w2 = jnp.abs(full[:, W2_OFF:W2_OFF + hp])                 # |hyper_w2(s)|
    b2h = jnp.maximum(full[:, B2H_OFF:B2H_OFF + hp], 0.0)     # relu; lane H==1.0

    # Mixing layer 2 + hyper_b2 second Linear (+ its bias, via the 1.0 lane)
    # fused into one lane reduction; padded lanes contribute exactly zero.
    total = jnp.sum(hidden * w2 + b2h * w2b_ref[...], axis=-1, keepdims=True)
    out_ref[...] = total                                      # (TB, 1)


# ------------------------------- host wrapper ------------------------------ #
def pack_params(params):
    """Pack the per-layer weights into the fused, 128-lane-padded layout."""
    (wh1, bh1, wb1, bb1, wh2, bh2, wb2a, bb2a, wb2b, bb2b) = params
    S, H, n = STATE_SHAPE, QMIX_HIDDEN, N_AGENTS

    wbig = jnp.zeros((LANES, NCAT), jnp.float32)
    # E block: q lane a -> ones over the first H lanes of q-rep segment a.
    for a in range(n):
        wbig = wbig.at[Q_OFF + a,
                       QREP_OFF + a * HP:QREP_OFF + a * HP + H].set(1.0)
    # hyper_w1 (+ its bias via the constant-1.0 row), one segment per agent.
    for a in range(n):
        c0 = W1_OFF + a * HP
        wbig = wbig.at[S_OFF:S_OFF + S, c0:c0 + H].set(wh1[:, a * H:(a + 1) * H])
        wbig = wbig.at[ONE_LANE, c0:c0 + H].set(bh1[0, a * H:(a + 1) * H])
    # hyper_b1
    wbig = wbig.at[S_OFF:S_OFF + S, B1_OFF:B1_OFF + H].set(wb1)
    wbig = wbig.at[ONE_LANE, B1_OFF:B1_OFF + H].set(bb1[0])
    # hyper_w2
    wbig = wbig.at[S_OFF:S_OFF + S, W2_OFF:W2_OFF + H].set(wh2)
    wbig = wbig.at[ONE_LANE, W2_OFF:W2_OFF + H].set(bh2[0])
    # hyper_b2 first layer (ReLU in-kernel) + a constant lane at H so that
    # relu(1.0) * bb2b folds the output bias into the lane reduction.
    wbig = wbig.at[S_OFF:S_OFF + S, B2H_OFF:B2H_OFF + H].set(wb2a)
    wbig = wbig.at[ONE_LANE, B2H_OFF:B2H_OFF + H].set(bb2a[0])
    wbig = wbig.at[ONE_LANE, B2H_OFF + H].set(1.0)

    # hyper_b2 second layer as a lane row: [wb2b (H) | bb2b | 0 ...]
    w2b_row = jnp.zeros((1, HP), jnp.float32)
    w2b_row = w2b_row.at[0, :H].set(wb2b[:, 0])
    w2b_row = w2b_row.at[0, H].set(bb2b[0, 0])
    return wbig, w2b_row


def qmix_mixer_forward(qsas, states, packed):
    """qsas: (episode_num, T, n_agents); states: (episode_num, T, state_shape)."""
    wbig, w2b_row = packed
    episode_num = qsas.shape[0]
    q2 = qsas.reshape(-1, N_AGENTS).astype(jnp.float32)        # (B, n)
    s2 = states.reshape(-1, STATE_SHAPE).astype(jnp.float32)   # (B, S)
    B = q2.shape[0]

    # Batch tiling: big tiles (amortize ~0.35us grid-step overhead), but split a
    # single large tile in two so the parallel axis can use both v7x TCs.
    tb = min(TB_MAX, _round_up(B, 128))
    if B > 256 and _round_up(B, tb) // tb == 1:
        tb = _round_up((B + 1) // 2, 128)
    Bp = _round_up(B, tb)
    num_tiles = Bp // tb

    # Slim 128-lane input row: [q | state | zero pad | 1.0].  Padded batch rows
    # are all-zero (their outputs are discarded).
    row = jnp.concatenate(
        [q2, s2,
         jnp.zeros((B, LANES - N_AGENTS - STATE_SHAPE - 1), jnp.float32),
         jnp.ones((B, 1), jnp.float32)], axis=1)               # (B, 128)
    xin = jnp.pad(row, ((0, Bp - B), (0, 0)))                  # (Bp, 128)

    kernel = functools.partial(qmix_mixer_kernel, n_agents=N_AGENTS, hp=HP)

    out = pl.pallas_call(
        kernel,
        out_shape=jax.ShapeDtypeStruct((Bp, 1), jnp.float32),
        grid_spec=pltpu.PrefetchScalarGridSpec(
            num_scalar_prefetch=0,
            grid=(num_tiles,),
            in_specs=[
                pl.BlockSpec((tb, LANES), lambda i: (i, 0)),
                pl.BlockSpec(wbig.shape, lambda i: (0, 0)),
                pl.BlockSpec(w2b_row.shape, lambda i: (0, 0)),
            ],
            out_specs=pl.BlockSpec((tb, 1), lambda i: (i, 0)),
        ),
        compiler_params=pltpu.CompilerParams(
            dimension_semantics=("parallel",),
            vmem_limit_bytes=48 * 1024 * 1024,   # headroom on v7x's 64 MiB VMEM
        ),
    )(xin, wbig, w2b_row)

    return out[:B, 0].reshape(episode_num, -1, 1)


# ----------------------------- params & reference -------------------------- #
def init_params(key):
    """Deterministic synthetic weights, shaped like the nn.Linear layers.

    Stored as (in_dim, out_dim) so math is x @ W + b.
    """
    ks = jax.random.split(key, 10)
    u = lambda k, shape, bound: jax.random.uniform(
        k, shape, jnp.float32, -bound, bound)
    sb = 1.0 / jnp.sqrt(STATE_SHAPE)
    hb = 1.0 / jnp.sqrt(QMIX_HIDDEN)
    wh1 = u(ks[0], (STATE_SHAPE, N_AGENTS * QMIX_HIDDEN), sb)
    bh1 = u(ks[1], (1, N_AGENTS * QMIX_HIDDEN), sb)
    wb1 = u(ks[2], (STATE_SHAPE, QMIX_HIDDEN), sb)
    bb1 = u(ks[3], (1, QMIX_HIDDEN), sb)
    wh2 = u(ks[4], (STATE_SHAPE, QMIX_HIDDEN), sb)
    bh2 = u(ks[5], (1, QMIX_HIDDEN), sb)
    wb2a = u(ks[6], (STATE_SHAPE, QMIX_HIDDEN), sb)
    bb2a = u(ks[7], (1, QMIX_HIDDEN), sb)
    wb2b = u(ks[8], (QMIX_HIDDEN, 1), hb)
    bb2b = u(ks[9], (1, 1), hb)
    return (wh1, bh1, wb1, bb1, wh2, bh2, wb2a, bb2a, wb2b, bb2b)


def reference_forward(qsas, states, params):
    """Pure-JAX replica of the PyTorch forward for validation."""
    (wh1, bh1, wb1, bb1, wh2, bh2, wb2a, bb2a, wb2b, bb2b) = params
    episode_num = qsas.shape[0]
    q2 = qsas.reshape(-1, 1, N_AGENTS)
    s2 = states.reshape(-1, STATE_SHAPE)
    w1 = jnp.abs(s2 @ wh1 + bh1).reshape(-1, N_AGENTS, QMIX_HIDDEN)
    b1 = (s2 @ wb1 + bb1).reshape(-1, 1, QMIX_HIDDEN)
    hidden = jax.nn.elu(jnp.einsum("bij,bjk->bik", q2, w1) + b1)
    w2 = jnp.abs(s2 @ wh2 + bh2).reshape(-1, QMIX_HIDDEN, 1)
    b2 = (jax.nn.relu(s2 @ wb2a + bb2a) @ wb2b + bb2b).reshape(-1, 1, 1)
    q_total = jnp.einsum("bij,bjk->bik", hidden, w2) + b2
    return q_total.reshape(episode_num, -1, 1)


if __name__ == "__main__":
    key = jax.random.PRNGKey(0)
    kp, kq, ks = jax.random.split(key, 3)
    params = init_params(kp)
    packed = pack_params(params)

    qsas = jax.random.normal(kq, (EPISODE_NUM, T_STEPS, N_AGENTS), jnp.float32)
    states = jax.random.normal(ks, (EPISODE_NUM, T_STEPS, STATE_SHAPE), jnp.float32)

    out = qmix_mixer_forward(qsas, states, packed)
    out = jax.block_until_ready(out)

    ref = reference_forward(qsas, states, params)
    assert out.shape == (EPISODE_NUM, T_STEPS, 1)
    assert jnp.allclose(out, ref, atol=1e-4, rtol=1e-4), "mismatch vs reference"

    print("KERNEL_OK")
</pallas_src>

<mosaic_0001>
module attributes {stable_mosaic.version = 11 : i64} {
  func.func @qmix_mixer_kernel(%arg0: i32, %arg1: memref<128x128xf32, #tpu.memory_space<vmem>>, %arg2: memref<128x2432xf32, #tpu.memory_space<vmem>>, %arg3: memref<1x128xf32, #tpu.memory_space<vmem>>, %arg4: memref<128x1xf32, #tpu.memory_space<vmem>>) attributes {dimension_semantics = [#tpu.dimension_semantics<parallel>], iteration_bounds = array<i64: 1>, scalar_prefetch = 0 : i64, scratch_operands = 0 : i64, tpu.core_type = #tpu.core_type<tc>, window_params = [{transform_indices = @transform_0, window_bounds = array<i64: 128, 128>}, {pipeline_mode = #tpu.pipeline_mode<synchronous>, transform_indices = @transform_1, window_bounds = array<i64: 128, 2432>}, {pipeline_mode = #tpu.pipeline_mode<synchronous>, transform_indices = @transform_2, window_bounds = array<i64: 1, 128>}, {transform_indices = @transform_3, window_bounds = array<i64: 128, 1>}]} {
    %c0 = arith.constant 0 : index
    %c0_0 = arith.constant 0 : index
    %0 = vector.load %arg1[%c0, %c0_0] : memref<128x128xf32, #tpu.memory_space<vmem>>, vector<128x128xf32>
    %c0_1 = arith.constant 0 : index
    %c0_2 = arith.constant 0 : index
    %1 = vector.load %arg2[%c0_1, %c0_2] : memref<128x2432xf32, #tpu.memory_space<vmem>>, vector<128x2432xf32>
    %cst = arith.constant dense<0.000000e+00> : vector<128x2432xf32>
    %2 = tpu.matmul %0, %1, %cst {dimension_numbers = #tpu.dot_dimension_numbers<[1], [0], [0], [1], [0, 0, 1, 1], [], []>} : vector<128x128xf32>, vector<128x2432xf32>, vector<128x2432xf32> -> vector<128x2432xf32>
    %3 = vector.extract_strided_slice %2 {offsets = [0, 2048], sizes = [128, 128], strides = [1, 1]} : vector<128x2432xf32> to vector<128x128xf32>
    %4 = vector.extract_strided_slice %2 {offsets = [0, 0], sizes = [128, 128], strides = [1, 1]} : vector<128x2432xf32> to vector<128x128xf32>
    %5 = vector.extract_strided_slice %2 {offsets = [0, 1024], sizes = [128, 128], strides = [1, 1]} : vector<128x2432xf32> to vector<128x128xf32>
    %6 = math.absf %5 : vector<128x128xf32>
    %7 = arith.mulf %4, %6 : vector<128x128xf32>
    %8 = arith.addf %3, %7 : vector<128x128xf32>
    %9 = vector.extract_strided_slice %2 {offsets = [0, 128], sizes = [128, 128], strides = [1, 1]} : vector<128x2432xf32> to vector<128x128xf32>
    %10 = vector.extract_strided_slice %2 {offsets = [0, 1152], sizes = [128, 128], strides = [1, 1]} : vector<128x2432xf32> to vector<128x128xf32>
    %11 = math.absf %10 : vector<128x128xf32>
    %12 = arith.mulf %9, %11 : vector<128x128xf32>
    %13 = arith.addf %8, %12 : vector<128x128xf32>
    %14 = vector.extract_strided_slice %2 {offsets = [0, 256], sizes = [128, 128], strides = [1, 1]} : vector<128x2432xf32> to vector<128x128xf32>
    %15 = vector.extract_strided_slice %2 {offsets = [0, 1280], sizes = [128, 128], strides = [1, 1]} : vector<128x2432xf32> to vector<128x128xf32>
    %16 = math.absf %15 : vector<128x128xf32>
    %17 = arith.mulf %14, %16 : vector<128x128xf32>
    %18 = arith.addf %13, %17 : vector<128x128xf32>
    %19 = vector.extract_strided_slice %2 {offsets = [0, 384], sizes = [128, 128], strides = [1, 1]} : vector<128x2432xf32> to vector<128x128xf32>
    %20 = vector.extract_strided_slice %2 {offsets = [0, 1408], sizes = [128, 128], strides = [1, 1]} : vector<128x2432xf32> to vector<128x128xf32>
    %21 = math.absf %20 : vector<128x128xf32>
    %22 = arith.mulf %19, %21 : vector<128x128xf32>
    %23 = arith.addf %18, %22 : vector<128x128xf32>
    %24 = vector.extract_strided_slice %2 {offsets = [0, 512], sizes = [128, 128], strides = [1, 1]} : vector<128x2432xf32> to vector<128x128xf32>
    %25 = vector.extract_strided_slice %2 {offsets = [0, 1536], sizes = [128, 128], strides = [1, 1]} : vector<128x2432xf32> to vector<128x128xf32>
    %26 = math.absf %25 : vector<128x128xf32>
    %27 = arith.mulf %24, %26 : vector<128x128xf32>
    %28 = arith.addf %23, %27 : vector<128x128xf32>
    %29 = vector.extract_strided_slice %2 {offsets = [0, 640], sizes = [128, 128], strides = [1, 1]} : vector<128x2432xf32> to vector<128x128xf32>
    %30 = vector.extract_strided_slice %2 {offsets = [0, 1664], sizes = [128, 128], strides = [1, 1]} : vector<128x2432xf32> to vector<128x128xf32>
    %31 = math.absf %30 : vector<128x128xf32>
    %32 = arith.mulf %29, %31 : vector<128x128xf32>
    %33 = arith.addf %28, %32 : vector<128x128xf32>
    %34 = vector.extract_strided_slice %2 {offsets = [0, 768], sizes = [128, 128], strides = [1, 1]} : vector<128x2432xf32> to vector<128x128xf32>
    %35 = vector.extract_strided_slice %2 {offsets = [0, 1792], sizes = [128, 128], strides = [1, 1]} : vector<128x2432xf32> to vector<128x128xf32>
    %36 = math.absf %35 : vector<128x128xf32>
    %37 = arith.mulf %34, %36 : vector<128x128xf32>
    %38 = arith.addf %33, %37 : vector<128x128xf32>
    %39 = vector.extract_strided_slice %2 {offsets = [0, 896], sizes = [128, 128], strides = [1, 1]} : vector<128x2432xf32> to vector<128x128xf32>
    %40 = vector.extract_strided_slice %2 {offsets = [0, 1920], sizes = [128, 128], strides = [1, 1]} : vector<128x2432xf32> to vector<128x128xf32>
    %41 = math.absf %40 : vector<128x128xf32>
    %42 = arith.mulf %39, %41 : vector<128x128xf32>
    %43 = arith.addf %38, %42 : vector<128x128xf32>
    %cst_3 = arith.constant 0.000000e+00 : f32
    %44 = vector.broadcast %cst_3 : f32 to vector<128x128xf32>
    %45 = arith.cmpf ogt, %43, %44 : vector<128x128xf32>
    %cst_4 = arith.constant 0.000000e+00 : f32
    %46 = vector.broadcast %cst_4 : f32 to vector<128x128xf32>
    %47 = arith.minimumf %43, %46 : vector<128x128xf32>
    %48 = math.exp %47 : vector<128x128xf32>
    %cst_5 = arith.constant 1.000000e+00 : f32
    %49 = vector.broadcast %cst_5 : f32 to vector<128x128xf32>
    %50 = arith.subf %48, %49 : vector<128x128xf32>
    %51 = arith.select %45, %43, %50 : vector<128x128xi1>, vector<128x128xf32>
    %52 = vector.extract_strided_slice %2 {offsets = [0, 2176], sizes = [128, 128], strides = [1, 1]} : vector<128x2432xf32> to vector<128x128xf32>
    %53 = math.absf %52 : vector<128x128xf32>
    %54 = vector.extract_strided_slice %2 {offsets = [0, 2304], sizes = [128, 128], strides = [1, 1]} : vector<128x2432xf32> to vector<128x128xf32>
    %cst_6 = arith.constant 0.000000e+00 : f32
    %55 = vector.broadcast %cst_6 : f32 to vector<128x128xf32>
    %56 = arith.maximumf %54, %55 : vector<128x128xf32>
    %57 = arith.mulf %51, %53 : vector<128x128xf32>
    %c0_7 = arith.constant 0 : index
    %c0_8 = arith.constant 0 : index
    %58 = vector.load %arg3[%c0_7, %c0_8] : memref<1x128xf32, #tpu.memory_space<vmem>>, vector<1x128xf32>
    %59 = vector.broadcast %58 : vector<1x128xf32> to vector<128x128xf32>
    %60 = arith.mulf %56, %59 : vector<128x128xf32>
    %61 = arith.addf %57, %60 : vector<128x128xf32>
    %cst_9 = arith.constant dense<0.000000e+00> : vector<128xf32>
    %62 = vector.multi_reduction <add>, %61, %cst_9 [1] : vector<128x128xf32> to vector<128xf32>
    %63 = vector.shape_cast %62 : vector<128xf32> to vector<128x1xf32>
    %c0_10 = arith.constant 0 : index
    %c0_11 = arith.constant 0 : index
    %64 = vector.load %arg4[%c0_10, %c0_11] : memref<128x1xf32, #tpu.memory_space<vmem>>, vector<128x1xf32>
    tpu.vector_store %arg4[%c0_10, %c0_11], %63 {strides = array<i32>} : memref<128x1xf32, #tpu.memory_space<vmem>>, vector<128x1xf32>,
    return
  }
  func.func @transform_0(%arg0: i32) -> (i32, i32) {
    %c0_i32 = arith.constant 0 : i32
    %c0_i32_0 = arith.constant 0 : i32
    return %arg0, %c0_i32 : i32, i32
  }
  func.func @transform_1(%arg0: i32) -> (i32, i32) {
    %c0_i32 = arith.constant 0 : i32
    %c0_i32_0 = arith.constant 0 : i32
    %c0_i32_1 = arith.constant 0 : i32
    return %c0_i32, %c0_i32_0 : i32, i32
  }
  func.func @transform_2(%arg0: i32) -> (i32, i32) {
    %c0_i32 = arith.constant 0 : i32
    %c0_i32_0 = arith.constant 0 : i32
    %c0_i32_1 = arith.constant 0 : i32
    return %c0_i32, %c0_i32_0 : i32, i32
  }
  func.func @transform_3(%arg0: i32) -> (i32, i32) {
    %c0_i32 = arith.constant 0 : i32
    %c0_i32_0 = arith.constant 0 : i32
    return %arg0, %c0_i32 : i32, i32
  }
}

</mosaic_0001>

<llo_original>
// kernel: tpu_custom_call.1
$region0: #{tpu_custom_call.1}
  #allocation0 [shape = 'u32[]', space=smem, size = 0x4, offset = 0x4, fixed_abs, tag = 'smem constant byte address 0x4 - core index']
  #allocation1 [shape = 'u32[144,128]{1,0:T(1,128)}', space=vmem, size = 0x12000, scoped, tag = 'internal scratch']
  %s0 = inlined_call_operand.hbm [shape: f32[128,128], index: 0, kind: input, shape index: {}]
  %s1 = inlined_call_operand.hbm [shape: f32[128,2432], index: 1, kind: input, shape index: {}]
  %s2 = inlined_call_operand.hbm [shape: f32[1,128], index: 2, kind: input, shape index: {}]
  %s3 = inlined_call_operand.vmem [shape: f32[128,1], index: 3, kind: output, shape index: {}]
  %s4 = sld [smem:[#allocation0]]
  $region34: #{tpu_custom_call.1} parent=0
    _
  %s6 = ssub.s32 1, %s4
  %s7 = scalar_select 0, %s6, %s4
  $region1: #{tpu_custom_call.1} parent=0
    #allocation2 [shape = 'u8[65536]{0}', space=vmem, size = 0x10000, scoped, tag = 'input window, operand 0, single buffered']
    #allocation3 [shape = 's32[1]{0}', space=sflag, size = 0x4, scoped, tag = 'scoped memory for tpu_custom_call.1']
    #allocation4 [shape = 'u8[1245184]{0}', space=vmem, size = 0x130000, scoped, tag = 'input window, operand 1, single buffered']
    #allocation5 [shape = 's32[1]{0}', space=sflag, size = 0x4, scoped, tag = 'scoped memory for tpu_custom_call.1']
    #allocation6 [shape = 'u8[512]{0}', space=vmem, size = 0x400, scoped, tag = 'input window, operand 2, single buffered']
    %8 = vsyncpa [#allocation3], 0
    %9 = vsyncpa [#allocation5], 0
    // Predicated region
    $region2: #{tpu_custom_call.1} parent=1 // pred_check
      _
    $region3: #{tpu_custom_call.1} parent=1 // pred_check_branch
      %11 = sbr.rel (0) target = $region5
    $region4: #{tpu_custom_call.1} parent=1 // pred_region
      %s13 = ssub.s32 2048, 2048
      %14 = vsyncadd [#allocation3], %s13
      %s15 = sshll.u32 [#allocation2], 4
      %s16 = int_to_ptr.vmem [resolvable:$true] %s15
      %21 = dma.hbm_to_vmem [thread:$0]  %s0, 2048, %s16, [#allocation3], 128, 128, 8
    $region5: #{tpu_custom_call.1} parent=1 // pred_fallthru
      _
    // Predicated region
    $region6: #{tpu_custom_call.1} parent=1 // pred_check
      _
    $region7: #{tpu_custom_call.1} parent=1 // pred_check_branch
      %23 = sbr.rel (0) target = $region9
    $region8: #{tpu_custom_call.1} parent=1 // pred_region
      %s25 = ssub.s32 38912, 38912
      %26 = vsyncadd [#allocation5], %s25
      %s27 = sshll.u32 [#allocation4], 4
      %s28 = int_to_ptr.vmem [resolvable:$true] %s27
      %33 = dma.hbm_to_vmem [thread:$0]  %s1, 38912, %s28, [#allocation5], 2432, 2432, 152
    $region9: #{tpu_custom_call.1} parent=1 // pred_fallthru
      _
    // Predicated region
    $region10: #{tpu_custom_call.1} parent=1 // pred_check
      _
    $region11: #{tpu_custom_call.1} parent=1 // pred_check_branch
      %35 = sbr.rel (0) target = $region13
    $region12: #{tpu_custom_call.1} parent=1 // pred_region
      %s37 = ssub.s32 16, 16
      %38 = vsyncadd [#allocation5], %s37
      %s40 = sshll.u32 [#allocation6], 4
      %s41 = int_to_ptr.vmem [resolvable:$true] %s40
      %43 = dma.hbm_to_vmem [thread:$0]  %s2, 16, %s41, [#allocation5]
    $region13: #{tpu_custom_call.1} parent=1 // pred_fallthru
      _
    // Predicated region
    $region14: #{tpu_custom_call.1} parent=1 // pred_check
      _
    $region15: #{tpu_custom_call.1} parent=1 // pred_check_branch
      %45 = sbr.rel (0) target = $region17
    $region16: #{tpu_custom_call.1} parent=1 // pred_region
      %46 = dma.done [#allocation3], 2048
    $region17: #{tpu_custom_call.1} parent=1 // pred_fallthru
      _
    // Predicated region
    $region18: #{tpu_custom_call.1} parent=1 // pred_check
      _
    $region19: #{tpu_custom_call.1} parent=1 // pred_check_branch
      %48 = sbr.rel (0) target = $region21
    $region20: #{tpu_custom_call.1} parent=1 // pred_region
      %49 = dma.done [#allocation5], 38912
    $region21: #{tpu_custom_call.1} parent=1 // pred_fallthru
      _
    // Predicated region
    $region22: #{tpu_custom_call.1} parent=1 // pred_check
      _
    $region23: #{tpu_custom_call.1} parent=1 // pred_check_branch
      %51 = sbr.rel (0) target = $region25
    $region24: #{tpu_custom_call.1} parent=1 // pred_region
      %52 = dma.done [#allocation5], 16
    $region25: #{tpu_custom_call.1} parent=1 // pred_fallthru
      _
    %v53 = vld [vmem:[#allocation2] sm:$0xff]
    %v54 = vld [vmem:[#allocation2 + $0x8] sm:$0xff]
    %v55 = vld [vmem:[#allocation2 + $0x10] sm:$0xff]
    %v56 = vld [vmem:[#allocation2 + $0x18] sm:$0xff]
    %v57 = vld [vmem:[#allocation2 + $0x20] sm:$0xff]
    %v58 = vld [vmem:[#allocation2 + $0x28] sm:$0xff]
    %v59 = vld [vmem:[#allocation2 + $0x30] sm:$0xff]
    %v60 = vld [vmem:[#allocation2 + $0x38] sm:$0xff]
    %v61 = vld [vmem:[#allocation2 + $0x40] sm:$0xff]
    %v62 = vld [vmem:[#allocation2 + $0x48] sm:$0xff]
    %v63 = vld [vmem:[#allocation2 + $0x50] sm:$0xff]
    %v64 = vld [vmem:[#allocation2 + $0x58] sm:$0xff]
    %v65 = vld [vmem:[#allocation2 + $0x60] sm:$0xff]
    %v66 = vld [vmem:[#allocation2 + $0x68] sm:$0xff]
    %v67 = vld [vmem:[#allocation2 + $0x70] sm:$0xff]
    %v68 = vld [vmem:[#allocation2 + $0x78] sm:$0xff]
    %v69 = vld [vmem:[#allocation4] sm:$0xff]
    %v70 = vld [vmem:[#allocation4 + $0x8] sm:$0xff]
    %v71 = vld [vmem:[#allocation4 + $0x10] sm:$0xff]
    %v72 = vld [vmem:[#allocation4 + $0x18] sm:$0xff]
    %v73 = vld [vmem:[#allocation4 + $0x20] sm:$0xff]
    %v74 = vld [vmem:[#allocation4 + $0x28] sm:$0xff]
    %v75 = vld [vmem:[#allocation4 + $0x30] sm:$0xff]
    %v76 = vld [vmem:[#allocation4 + $0x38] sm:$0xff]
    %v77 = vld [vmem:[#allocation4 + $0x40] sm:$0xff]
    %v78 = vld [vmem:[#allocation4 + $0x48] sm:$0xff]
    %v79 = vld [vmem:[#allocation4 + $0x50] sm:$0xff]
    %v80 = vld [vmem:[#allocation4 + $0x58] sm:$0xff]
    %v81 = vld [vmem:[#allocation4 + $0x60] sm:$0xff]
    %v82 = vld [vmem:[#allocation4 + $0x68] sm:$0xff]
    %v83 = vld [vmem:[#allocation4 + $0x70] sm:$0xff]
    %v84 = vld [vmem:[#allocation4 + $0x78] sm:$0xff]
    %v85 = vld [vmem:[#allocation4 + $0x80] sm:$0xff]
    %v86 = vld [vmem:[#allocation4 + $0x88] sm:$0xff]
    %v87 = vld [vmem:[#allocation4 + $0x90] sm:$0xff]
    %v88 = vld [vmem:[#allocation4 + $0x98] sm:$0xff]
    %v89 = vld [vmem:[#allocation4 + $0xa0] sm:$0xff]
    %v90 = vld [vmem:[#allocation4 + $0xa8] sm:$0xff]
    %v91 = vld [vmem:[#allocation4 + $0xb0] sm:$0xff]
    %v92 = vld [vmem:[#allocation4 + $0xb8] sm:$0xff]
    %v93 = vld [vmem:[#allocation4 + $0xc0] sm:$0xff]
    %v94 = vld [vmem:[#allocation4 + $0xc8] sm:$0xff]
    %v95 = vld [vmem:[#allocation4 + $0xd0] sm:$0xff]
    %v96 = vld [vmem:[#allocation4 + $0xd8] sm:$0xff]
    %v97 = vld [vmem:[#allocation4 + $0xe0] sm:$0xff]
    %v98 = vld [vmem:[#allocation4 + $0xe8] sm:$0xff]
    %v99 = vld [vmem:[#allocation4 + $0xf0] sm:$0xff]
    %v100 = vld [vmem:[#allocation4 + $0xf8] sm:$0xff]
    %v101 = vld [vmem:[#allocation4 + $0x100] sm:$0xff]
    %v102 = vld [vmem:[#allocation4 + $0x108] sm:$0xff]
    %v103 = vld [vmem:[#allocation4 + $0x110] sm:$0xff]
    %v104 = vld [vmem:[#allocation4 + $0x118] sm:$0xff]
    %v105 = vld [vmem:[#allocation4 + $0x120] sm:$0xff]
    %v106 = vld [vmem:[#allocation4 + $0x128] sm:$0xff]
    %v107 = vld [vmem:[#allocation4 + $0x130] sm:$0xff]
    %v108 = vld [vmem:[#allocation4 + $0x138] sm:$0xff]
    %v109 = vld [vmem:[#allocation4 + $0x140] sm:$0xff]
    %v110 = vld [vmem:[#allocation4 + $0x148] sm:$0xff]
    %v111 = vld [vmem:[#allocation4 + $0x150] sm:$0xff]
    %v112 = vld [vmem:[#allocation4 + $0x158] sm:$0xff]
    %v113 = vld [vmem:[#allocation4 + $0x160] sm:$0xff]
    %v114 = vld [vmem:[#allocation4 + $0x168] sm:$0xff]
    %v115 = vld [vmem:[#allocation4 + $0x170] sm:$0xff]
    %v116 = vld [vmem:[#allocation4 + $0x178] sm:$0xff]
    %v117 = vld [vmem:[#allocation4 + $0x180] sm:$0xff]
    %v118 = vld [vmem:[#allocation4 + $0x188] sm:$0xff]
    %v119 = vld [vmem:[#allocation4 + $0x190] sm:$0xff]
    %v120 = vld [vmem:[#allocation4 + $0x198] sm:$0xff]
    %v121 = vld [vmem:[#allocation4 + $0x1a0] sm:$0xff]
    %v122 = vld [vmem:[#allocation4 + $0x1a8] sm:$0xff]
    %v123 = vld [vmem:[#allocation4 + $0x1b0] sm:$0xff]
    %v124 = vld [vmem:[#allocation4 + $0x1b8] sm:$0xff]
    %v125 = vld [vmem:[#allocation4 + $0x1c0] sm:$0xff]
    %v126 = vld [vmem:[#allocation4 + $0x1c8] sm:$0xff]
    %v127 = vld [vmem:[#allocation4 + $0x1d0] sm:$0xff]
    %v128 = vld [vmem:[#allocation4 + $0x1d8] sm:$0xff]
    %v129 = vld [vmem:[#allocation4 + $0x1e0] sm:$0xff]
    %v130 = vld [vmem:[#allocation4 + $0x1e8] sm:$0xff]
    %v131 = vld [vmem:[#allocation4 + $0x1f0] sm:$0xff]
    %v132 = vld [vmem:[#allocation4 + $0x1f8] sm:$0xff]
    %v133 = vld [vmem:[#allocation4 + $0x200] sm:$0xff]
    %v134 = vld [vmem:[#allocation4 + $0x208] sm:$0xff]
    %v135 = vld [vmem:[#allocation4 + $0x210] sm:$0xff]
    %v136 = vld [vmem:[#allocation4 + $0x218] sm:$0xff]
    %v137 = vld [vmem:[#allocation4 + $0x220] sm:$0xff]
    %v138 = vld [vmem:[#allocation4 + $0x228] sm:$0xff]
    %v139 = vld [vmem:[#allocation4 + $0x230] sm:$0xff]
    %v140 = vld [vmem:[#allocation4 + $0x238] sm:$0xff]
    %v141 = vld [vmem:[#allocation4 + $0x240] sm:$0xff]
    %v142 = vld [vmem:[#allocation4 + $0x248] sm:$0xff]
    %v143 = vld [vmem:[#allocation4 + $0x250] sm:$0xff]
    %v144 = vld [vmem:[#allocation4 + $0x258] sm:$0xff]
    %v145 = vld [vmem:[#allocation4 + $0x260] sm:$0xff]
    %v146 = vld [vmem:[#allocation4 + $0x268] sm:$0xff]
    %v147 = vld [vmem:[#allocation4 + $0x270] sm:$0xff]
    %v148 = vld [vmem:[#allocation4 + $0x278] sm:$0xff]
    %v149 = vld [vmem:[#allocation4 + $0x280] sm:$0xff]
    %v150 = vld [vmem:[#allocation4 + $0x288] sm:$0xff]
    %v151 = vld [vmem:[#allocation4 + $0x290] sm:$0xff]
    %v152 = vld [vmem:[#allocation4 + $0x298] sm:$0xff]
    %v153 = vld [vmem:[#allocation4 + $0x2a0] sm:$0xff]
    %v154 = vld [vmem:[#allocation4 + $0x2a8] sm:$0xff]
    %v155 = vld [vmem:[#allocation4 + $0x2b0] sm:$0xff]
    %v156 = vld [vmem:[#allocation4 + $0x2b8] sm:$0xff]
    %v157 = vld [vmem:[#allocation4 + $0x2c0] sm:$0xff]
    %v158 = vld [vmem:[#allocation4 + $0x2c8] sm:$0xff]
    %v159 = vld [vmem:[#allocation4 + $0x2d0] sm:$0xff]
    %v160 = vld [vmem:[#allocation4 + $0x2d8] sm:$0xff]
    %v161 = vld [vmem:[#allocation4 + $0x2e0] sm:$0xff]
    %v162 = vld [vmem:[#allocation4 + $0x2e8] sm:$0xff]
    %v163 = vld [vmem:[#allocation4 + $0x2f0] sm:$0xff]
    %v164 = vld [vmem:[#allocation4 + $0x2f8] sm:$0xff]
    %v165 = vld [vmem:[#allocation4 + $0x300] sm:$0xff]
    %v166 = vld [vmem:[#allocation4 + $0x308] sm:$0xff]
    %v167 = vld [vmem:[#allocation4 + $0x310] sm:$0xff]
    %v168 = vld [vmem:[#allocation4 + $0x318] sm:$0xff]
    %v169 = vld [vmem:[#allocation4 + $0x320] sm:$0xff]
    %v170 = vld [vmem:[#allocation4 + $0x328] sm:$0xff]
    %v171 = vld [vmem:[#allocation4 + $0x330] sm:$0xff]
    %v172 = vld [vmem:[#allocation4 + $0x338] sm:$0xff]
    %v173 = vld [vmem:[#allocation4 + $0x340] sm:$0xff]
    %v174 = vld [vmem:[#allocation4 + $0x348] sm:$0xff]
    %v175 = vld [vmem:[#allocation4 + $0x350] sm:$0xff]
    %v176 = vld [vmem:[#allocation4 + $0x358] sm:$0xff]
    %v177 = vld [vmem:[#allocation4 + $0x360] sm:$0xff]
    %v178 = vld [vmem:[#allocation4 + $0x368] sm:$0xff]
    %v179 = vld [vmem:[#allocation4 + $0x370] sm:$0xff]
    %v180 = vld [vmem:[#allocation4 + $0x378] sm:$0xff]
    %v181 = vld [vmem:[#allocation4 + $0x380] sm:$0xff]
    %v182 = vld [vmem:[#allocation4 + $0x388] sm:$0xff]
    %v183 = vld [vmem:[#allocation4 + $0x390] sm:$0xff]
    %v184 = vld [vmem:[#allocation4 + $0x398] sm:$0xff]
    %v185 = vld [vmem:[#allocation4 + $0x3a0] sm:$0xff]
    %v186 = vld [vmem:[#allocation4 + $0x3a8] sm:$0xff]
    %v187 = vld [vmem:[#allocation4 + $0x3b0] sm:$0xff]
    %v188 = vld [vmem:[#allocation4 + $0x3b8] sm:$0xff]
    %v189 = vld [vmem:[#allocation4 + $0x3c0] sm:$0xff]
    %v190 = vld [vmem:[#allocation4 + $0x3c8] sm:$0xff]
    %v191 = vld [vmem:[#allocation4 + $0x3d0] sm:$0xff]
    %v192 = vld [vmem:[#allocation4 + $0x3d8] sm:$0xff]
    %v193 = vld [vmem:[#allocation4 + $0x3e0] sm:$0xff]
    %v194 = vld [vmem:[#allocation4 + $0x3e8] sm:$0xff]
    %v195 = vld [vmem:[#allocation4 + $0x3f0] sm:$0xff]
    %v196 = vld [vmem:[#allocation4 + $0x3f8] sm:$0xff]
    %v197 = vld [vmem:[#allocation4 + $0x400] sm:$0xff]
    %v198 = vld [vmem:[#allocation4 + $0x408] sm:$0xff]
    %v199 = vld [vmem:[#allocation4 + $0x410] sm:$0xff]
    %v200 = vld [vmem:[#allocation4 + $0x418] sm:$0xff]
    %v201 = vld [vmem:[#allocation4 + $0x420] sm:$0xff]
    %v202 = vld [vmem:[#allocation4 + $0x428] sm:$0xff]
    %v203 = vld [vmem:[#allocation4 + $0x430] sm:$0xff]
    %v204 = vld [vmem:[#allocation4 + $0x438] sm:$0xff]
    %v205 = vld [vmem:[#allocation4 + $0x440] sm:$0xff]
    %v206 = vld [vmem:[#allocation4 + $0x448] sm:$0xff]
    %v207 = vld [vmem:[#allocation4 + $0x450] sm:$0xff]
    %v208 = vld [vmem:[#allocation4 + $0x458] sm:$0xff]
    %v209 = vld [vmem:[#allocation4 + $0x460] sm:$0xff]
    %v210 = vld [vmem:[#allocation4 + $0x468] sm:$0xff]
    %v211 = vld [vmem:[#allocation4 + $0x470] sm:$0xff]
    %v212 = vld [vmem:[#allocation4 + $0x478] sm:$0xff]
    %v213 = vld [vmem:[#allocation4 + $0x480] sm:$0xff]
    %v214 = vld [vmem:[#allocation4 + $0x488] sm:$0xff]
    %v215 = vld [vmem:[#allocation4 + $0x490] sm:$0xff]
    %v216 = vld [vmem:[#allocation4 + $0x498] sm:$0xff]
    %v217 = vld [vmem:[#allocation4 + $0x4a0] sm:$0xff]
    %v218 = vld [vmem:[#allocation4 + $0x4a8] sm:$0xff]
    %v219 = vld [vmem:[#allocation4 + $0x4b0] sm:$0xff]
    %v220 = vld [vmem:[#allocation4 + $0x4b8] sm:$0xff]
    %v221 = vld [vmem:[#allocation4 + $0x4c0] sm:$0xff]
    %v222 = vld [vmem:[#allocation4 + $0x4c8] sm:$0xff]
    %v223 = vld [vmem:[#allocation4 + $0x4d0] sm:$0xff]
    %v224 = vld [vmem:[#allocation4 + $0x4d8] sm:$0xff]
    %v225 = vld [vmem:[#allocation4 + $0x4e0] sm:$0xff]
    %v226 = vld [vmem:[#allocation4 + $0x4e8] sm:$0xff]
    %v227 = vld [vmem:[#allocation4 + $0x4f0] sm:$0xff]
    %v228 = vld [vmem:[#allocation4 + $0x4f8] sm:$0xff]
    %v229 = vld [vmem:[#allocation4 + $0x500] sm:$0xff]
    %v230 = vld [vmem:[#allocation4 + $0x508] sm:$0xff]
    %v231 = vld [vmem:[#allocation4 + $0x510] sm:$0xff]
    %v232 = vld [vmem:[#allocation4 + $0x518] sm:$0xff]
    %v233 = vld [vmem:[#allocation4 + $0x520] sm:$0xff]
    %v234 = vld [vmem:[#allocation4 + $0x528] sm:$0xff]
    %v235 = vld [vmem:[#allocation4 + $0x530] sm:$0xff]
    %v236 = vld [vmem:[#allocation4 + $0x538] sm:$0xff]
    %v237 = vld [vmem:[#allocation4 + $0x540] sm:$0xff]
    %v238 = vld [vmem:[#allocation4 + $0x548] sm:$0xff]
    %v239 = vld [vmem:[#allocation4 + $0x550] sm:$0xff]
    %v240 = vld [vmem:[#allocation4 + $0x558] sm:$0xff]
    %v241 = vld [vmem:[#allocation4 + $0x560] sm:$0xff]
    %v242 = vld [vmem:[#allocation4 + $0x568] sm:$0xff]
    %v243 = vld [vmem:[#allocation4 + $0x570] sm:$0xff]
    %v244 = vld [vmem:[#allocation4 + $0x578] sm:$0xff]
    %v245 = vld [vmem:[#allocation4 + $0x580] sm:$0xff]
    %v246 = vld [vmem:[#allocation4 + $0x588] sm:$0xff]
    %v247 = vld [vmem:[#allocation4 + $0x590] sm:$0xff]
    %v248 = vld [vmem:[#allocation4 + $0x598] sm:$0xff]
    %v249 = vld [vmem:[#allocation4 + $0x5a0] sm:$0xff]
    %v250 = vld [vmem:[#allocation4 + $0x5a8] sm:$0xff]
    %v251 = vld [vmem:[#allocation4 + $0x5b0] sm:$0xff]
    %v252 = vld [vmem:[#allocation4 + $0x5b8] sm:$0xff]
    %v253 = vld [vmem:[#allocation4 + $0x5c0] sm:$0xff]
    %v254 = vld [vmem:[#allocation4 + $0x5c8] sm:$0xff]
    %v255 = vld [vmem:[#allocation4 + $0x5d0] sm:$0xff]
    %v256 = vld [vmem:[#allocation4 + $0x5d8] sm:$0xff]
    %v257 = vld [vmem:[#allocation4 + $0x5e0] sm:$0xff]
    %v258 = vld [vmem:[#allocation4 + $0x5e8] sm:$0xff]
    %v259 = vld [vmem:[#allocation4 + $0x5f0] sm:$0xff]
    %v260 = vld [vmem:[#allocation4 + $0x5f8] sm:$0xff]
    %v261 = vld [vmem:[#allocation4 + $0x600] sm:$0xff]
    %v262 = vld [vmem:[#allocation4 + $0x608] sm:$0xff]
    %v263 = vld [vmem:[#allocation4 + $0x610] sm:$0xff]
    %v264 = vld [vmem:[#allocation4 + $0x618] sm:$0xff]
    %v265 = vld [vmem:[#allocation4 + $0x620] sm:$0xff]
    %v266 = vld [vmem:[#allocation4 + $0x628] sm:$0xff]
    %v267 = vld [vmem:[#allocation4 + $0x630] sm:$0xff]
    %v268 = vld [vmem:[#allocation4 + $0x638] sm:$0xff]
    %v269 = vld [vmem:[#allocation4 + $0x640] sm:$0xff]
    %v270 = vld [vmem:[#allocation4 + $0x648] sm:$0xff]
    %v271 = vld [vmem:[#allocation4 + $0x650] sm:$0xff]
    %v272 = vld [vmem:[#allocation4 + $0x658] sm:$0xff]
    %v273 = vld [vmem:[#allocation4 + $0x660] sm:$0xff]
    %v274 = vld [vmem:[#allocation4 + $0x668] sm:$0xff]
    %v275 = vld [vmem:[#allocation4 + $0x670] sm:$0xff]
    %v276 = vld [vmem:[#allocation4 + $0x678] sm:$0xff]
    %v277 = vld [vmem:[#allocation4 + $0x680] sm:$0xff]
    %v278 = vld [vmem:[#allocation4 + $0x688] sm:$0xff]
    %v279 = vld [vmem:[#allocation4 + $0x690] sm:$0xff]
    %v280 = vld [vmem:[#allocation4 + $0x698] sm:$0xff]
    %v281 = vld [vmem:[#allocation4 + $0x6a0] sm:$0xff]
    %v282 = vld [vmem:[#allocation4 + $0x6a8] sm:$0xff]
    %v283 = vld [vmem:[#allocation4 + $0x6b0] sm:$0xff]
    %v284 = vld [vmem:[#allocation4 + $0x6b8] sm:$0xff]
    %v285 = vld [vmem:[#allocation4 + $0x6c0] sm:$0xff]
    %v286 = vld [vmem:[#allocation4 + $0x6c8] sm:$0xff]
    %v287 = vld [vmem:[#allocation4 + $0x6d0] sm:$0xff]
    %v288 = vld [vmem:[#allocation4 + $0x6d8] sm:$0xff]
    %v289 = vld [vmem:[#allocation4 + $0x6e0] sm:$0xff]
    %v290 = vld [vmem:[#allocation4 + $0x6e8] sm:$0xff]
    %v291 = vld [vmem:[#allocation4 + $0x6f0] sm:$0xff]
    %v292 = vld [vmem:[#allocation4 + $0x6f8] sm:$0xff]
    %v293 = vld [vmem:[#allocation4 + $0x700] sm:$0xff]
    %v294 = vld [vmem:[#allocation4 + $0x708] sm:$0xff]
    %v295 = vld [vmem:[#allocation4 + $0x710] sm:$0xff]
    %v296 = vld [vmem:[#allocation4 + $0x718] sm:$0xff]
    %v297 = vld [vmem:[#allocation4 + $0x720] sm:$0xff]
    %v298 = vld [vmem:[#allocation4 + $0x728] sm:$0xff]
    %v299 = vld [vmem:[#allocation4 + $0x730] sm:$0xff]
    %v300 = vld [vmem:[#allocation4 + $0x738] sm:$0xff]
    %v301 = vld [vmem:[#allocation4 + $0x740] sm:$0xff]
    %v302 = vld [vmem:[#allocation4 + $0x748] sm:$0xff]
    %v303 = vld [vmem:[#allocation4 + $0x750] sm:$0xff]
    %v304 = vld [vmem:[#allocation4 + $0x758] sm:$0xff]
    %v305 = vld [vmem:[#allocation4 + $0x760] sm:$0xff]
    %v306 = vld [vmem:[#allocation4 + $0x768] sm:$0xff]
    %v307 = vld [vmem:[#allocation4 + $0x770] sm:$0xff]
    %v308 = vld [vmem:[#allocation4 + $0x778] sm:$0xff]
    %v309 = vld [vmem:[#allocation4 + $0x780] sm:$0xff]
    %v310 = vld [vmem:[#allocation4 + $0x788] sm:$0xff]
    %v311 = vld [vmem:[#allocation4 + $0x790] sm:$0xff]
    %v312 = vld [vmem:[#allocation4 + $0x798] sm:$0xff]
    %v313 = vld [vmem:[#allocation4 + $0x7a0] sm:$0xff]
    %v314 = vld [vmem:[#allocation4 + $0x7a8] sm:$0xff]
    %v315 = vld [vmem:[#allocation4 + $0x7b0] sm:$0xff]
    %v316 = vld [vmem:[#allocation4 + $0x7b8] sm:$0xff]
    %v317 = vld [vmem:[#allocation4 + $0x7c0] sm:$0xff]
    %v318 = vld [vmem:[#allocation4 + $0x7c8] sm:$0xff]
    %v319 = vld [vmem:[#allocation4 + $0x7d0] sm:$0xff]
    %v320 = vld [vmem:[#allocation4 + $0x7d8] sm:$0xff]
    %v321 = vld [vmem:[#allocation4 + $0x7e0] sm:$0xff]
    %v322 = vld [vmem:[#allocation4 + $0x7e8] sm:$0xff]
    %v323 = vld [vmem:[#allocation4 + $0x7f0] sm:$0xff]
    %v324 = vld [vmem:[#allocation4 + $0x7f8] sm:$0xff]
    %v325 = vld [vmem:[#allocation4 + $0x800] sm:$0xff]
    %v326 = vld [vmem:[#allocation4 + $0x808] sm:$0xff]
    %v327 = vld [vmem:[#allocation4 + $0x810] sm:$0xff]
    %v328 = vld [vmem:[#allocation4 + $0x818] sm:$0xff]
    %v329 = vld [vmem:[#allocation4 + $0x820] sm:$0xff]
    %v330 = vld [vmem:[#allocation4 + $0x828] sm:$0xff]
    %v331 = vld [vmem:[#allocation4 + $0x830] sm:$0xff]
    %v332 = vld [vmem:[#allocation4 + $0x838] sm:$0xff]
    %v333 = vld [vmem:[#allocation4 + $0x840] sm:$0xff]
    %v334 = vld [vmem:[#allocation4 + $0x848] sm:$0xff]
    %v335 = vld [vmem:[#allocation4 + $0x850] sm:$0xff]
    %v336 = vld [vmem:[#allocation4 + $0x858] sm:$0xff]
    %v337 = vld [vmem:[#allocation4 + $0x860] sm:$0xff]
    %v338 = vld [vmem:[#allocation4 + $0x868] sm:$0xff]
    %v339 = vld [vmem:[#allocation4 + $0x870] sm:$0xff]
    %v340 = vld [vmem:[#allocation4 + $0x878] sm:$0xff]
    %v341 = vld [vmem:[#allocation4 + $0x880] sm:$0xff]
    %v342 = vld [vmem:[#allocation4 + $0x888] sm:$0xff]
    %v343 = vld [vmem:[#allocation4 + $0x890] sm:$0xff]
    %v344 = vld [vmem:[#allocation4 + $0x898] sm:$0xff]
    %v345 = vld [vmem:[#allocation4 + $0x8a0] sm:$0xff]
    %v346 = vld [vmem:[#allocation4 + $0x8a8] sm:$0xff]
    %v347 = vld [vmem:[#allocation4 + $0x8b0] sm:$0xff]
    %v348 = vld [vmem:[#allocation4 + $0x8b8] sm:$0xff]
    %v349 = vld [vmem:[#allocation4 + $0x8c0] sm:$0xff]
    %v350 = vld [vmem:[#allocation4 + $0x8c8] sm:$0xff]
    %v351 = vld [vmem:[#allocation4 + $0x8d0] sm:$0xff]
    %v352 = vld [vmem:[#allocation4 + $0x8d8] sm:$0xff]
    %v353 = vld [vmem:[#allocation4 + $0x8e0] sm:$0xff]
    %v354 = vld [vmem:[#allocation4 + $0x8e8] sm:$0xff]
    %v355 = vld [vmem:[#allocation4 + $0x8f0] sm:$0xff]
    %v356 = vld [vmem:[#allocation4 + $0x8f8] sm:$0xff]
    %v357 = vld [vmem:[#allocation4 + $0x900] sm:$0xff]
    %v358 = vld [vmem:[#allocation4 + $0x908] sm:$0xff]
    %v359 = vld [vmem:[#allocation4 + $0x910] sm:$0xff]
    %v360 = vld [vmem:[#allocation4 + $0x918] sm:$0xff]
    %v361 = vld [vmem:[#allocation4 + $0x920] sm:$0xff]
    %v362 = vld [vmem:[#allocation4 + $0x928] sm:$0xff]
    %v363 = vld [vmem:[#allocation4 + $0x930] sm:$0xff]
    %v364 = vld [vmem:[#allocation4 + $0x938] sm:$0xff]
    %v365 = vld [vmem:[#allocation4 + $0x940] sm:$0xff]
    %v366 = vld [vmem:[#allocation4 + $0x948] sm:$0xff]
    %v367 = vld [vmem:[#allocation4 + $0x950] sm:$0xff]
    %v368 = vld [vmem:[#allocation4 + $0x958] sm:$0xff]
    %v369 = vld [vmem:[#allocation4 + $0x960] sm:$0xff]
    %v370 = vld [vmem:[#allocation4 + $0x968] sm:$0xff]
    %v371 = vld [vmem:[#allocation4 + $0x970] sm:$0xff]
    %v372 = vld [vmem:[#allocation4 + $0x978] sm:$0xff]
    %373 = vmatprep.subr.mxu0 %v70
    %374 = vmatpush1.msra.mxu0 %v69
    %375 = vmatprep.subr.mxu0 %v89
    %376 = vmatpush1.msra.mxu0 %v88
    %377 = vmatprep.subr.mxu0 %v108
    %378 = vmatpush1.msra.mxu0 %v107
    %379 = vmatprep.subr.mxu0 %v127
    %380 = vmatpush1.msra.mxu0 %v126
    %381 = vmatprep.subr.mxu0 %v146
    %382 = vmatpush1.msra.mxu0 %v145
    %383 = vmatprep.subr.mxu0 %v165
    %384 = vmatpush1.msra.mxu0 %v164
    %385 = vmatprep.subr.mxu0 %v184
    %386 = vmatpush1.msra.mxu0 %v183
    %387 = vmatprep.subr.mxu0 %v203
    %388 = vmatpush1.msra.mxu0 %v202
    %389 = vmatprep.subr.mxu0 %v222
    %390 = vmatpush1.msra.mxu0 %v221
    %391 = vmatprep.subr.mxu0 %v241
    %392 = vmatpush1.msra.mxu0 %v240
    %393 = vmatprep.subr.mxu0 %v260
    %394 = vmatpush1.msra.mxu0 %v259
    %395 = vmatprep.subr.mxu0 %v279
    %396 = vmatpush1.msra.mxu0 %v278
    %397 = vmatprep.subr.mxu0 %v298
    %398 = vmatpush1.msra.mxu0 %v297
    %399 = vmatprep.subr.mxu0 %v317
    %400 = vmatpush1.msra.mxu0 %v316
    %401 = vmatprep.subr.mxu0 %v336
    %402 = vmatpush1.msra.mxu0 %v335
    %403 = vmatprep.subr.mxu0 %v355
    %404 = vmatpush1.msra.mxu0 %v354
    %405 = vmatprep.subr.mxu0 0.0
    %406 = vmatpush1.msra.mxu0 0.0
    %407 = vmatprep.subr.mxu0 0.0
    %408 = vmatpush1.msra.mxu0 0.0
    %409 = vmatprep.subr.mxu0 0.0
    %410 = vmatpush1.msra.mxu0 0.0
    %411 = vmatprep.subr.mxu0 0.0
    %412 = vmatpush1.msra.mxu0 0.0
    %413 = vmatprep.subr.mxu0 0.0
    %414 = vmatpush1.msra.mxu0 0.0
    %415 = vmatprep.subr.mxu0 0.0
    %416 = vmatpush1.msra.mxu0 0.0
    %417 = vmatprep.subr.mxu0 0.0
    %418 = vmatpush1.msra.mxu0 0.0
    %419 = vmatprep.subr.mxu0 0.0
    %420 = vmatpush1.msra.mxu0 0.0
    %421 = vmatprep.subr.mxu0 0.0
    %422 = vmatpush1.msra.mxu0 0.0
    %423 = vmatprep.subr.mxu0 0.0
    %424 = vmatpush1.msra.mxu0 0.0
    %425 = vmatprep.subr.mxu0 0.0
    %426 = vmatpush1.msra.mxu0 0.0
    %427 = vmatprep.subr.mxu0 0.0
    %428 = vmatpush1.msra.mxu0 0.0
    %429 = vmatprep.subr.mxu0 0.0
    %430 = vmatpush1.msra.mxu0 0.0
    %431 = vmatprep.subr.mxu0 0.0
    %432 = vmatpush1.msra.mxu0 0.0
    %433 = vmatprep.subr.mxu0 0.0
    %434 = vmatpush1.msra.mxu0 0.0
    %435 = vmatprep.subr.mxu0 0.0
    %436 = vmatpush1.msra.mxu0 0.0
    %437 = vmatprep.mubr.f32.mxu0 0.0
    %438 = vmatmul.mubr.f32.gmra.mrb[0].mxu0 %v53
    %v439 = vpop.f32.mrb[0].mxu0
    %v440 = vadd.f32 0.0, %v439
    %v441 = vpop.f32.mrb[0].mxu0
    %v442 = vadd.f32 0.0, %v441
    %443 = vmatprep.mubr.f32.mxu0 0.0
    %444 = vmatmul.mubr.f32.gmra.mrb[0].mxu0 %v54
    %v445 = vpop.f32.mrb[0].mxu0
    %v446 = vadd.f32 0.0, %v445
    %v447 = vpop.f32.mrb[0].mxu0
    %v448 = vadd.f32 0.0, %v447
    %449 = vmatprep.mubr.f32.mxu0 0.0
    %450 = vmatmul.mubr.f32.gmra.mrb[0].mxu0 %v55
    %v451 = vpop.f32.mrb[0].mxu0
    %v452 = vadd.f32 0.0, %v451
    %v453 = vpop.f32.mrb[0].mxu0
    %v454 = vadd.f32 0.0, %v453
    %455 = vmatprep.mubr.f32.mxu0 0.0
    %456 = vmatmul.mubr.f32.gmra.mrb[0].mxu0 %v56
    %v457 = vpop.f32.mrb[0].mxu0
    %v458 = vadd.f32 0.0, %v457
    %v459 = vpop.f32.mrb[0].mxu0
    %v460 = vadd.f32 0.0, %v459
    %461 = vmatprep.mubr.f32.mxu0 0.0
    %462 = vmatmul.mubr.f32.gmra.mrb[0].mxu0 %v57
    %v463 = vpop.f32.mrb[0].mxu0
    %v464 = vadd.f32 0.0, %v463
    %v465 = vpop.f32.mrb[0].mxu0
    %v466 = vadd.f32 0.0, %v465
    %467 = vmatprep.mubr.f32.mxu0 0.0
    %468 = vmatmul.mubr.f32.gmra.mrb[0].mxu0 %v58
    %v469 = vpop.f32.mrb[0].mxu0
    %v470 = vadd.f32 0.0, %v469
    %v471 = vpop.f32.mrb[0].mxu0
    %v472 = vadd.f32 0.0, %v471
    %473 = vmatprep.mubr.f32.mxu0 0.0
    %474 = vmatmul.mubr.f32.gmra.mrb[0].mxu0 %v59
    %v475 = vpop.f32.mrb[0].mxu0
    %v476 = vadd.f32 0.0, %v475
    %v477 = vpop.f32.mrb[0].mxu0
    %v478 = vadd.f32 0.0, %v477
    %479 = vmatprep.mubr.f32.mxu0 0.0
    %480 = vmatmul.mubr.f32.gmra.mrb[0].mxu0 %v60
    %v481 = vpop.f32.mrb[0].mxu0
    %v482 = vadd.f32 0.0, %v481
    %v483 = vpop.f32.mrb[0].mxu0
    %v484 = vadd.f32 0.0, %v483
    %485 = vmatprep.mubr.f32.mxu0 0.0
    %486 = vmatmul.mubr.f32.gmra.mrb[0].mxu0 %v61
    %v487 = vpop.f32.mrb[0].mxu0
    %v488 = vadd.f32 0.0, %v487
    %v489 = vpop.f32.mrb[0].mxu0
    %v490 = vadd.f32 0.0, %v489
    %491 = vmatprep.mubr.f32.mxu0 0.0
    %492 = vmatmul.mubr.f32.gmra.mrb[0].mxu0 %v62
    %v493 = vpop.f32.mrb[0].mxu0
    %v494 = vadd.f32 0.0, %v493
    %v495 = vpop.f32.mrb[0].mxu0
    %v496 = vadd.f32 0.0, %v495
    %497 = vmatprep.mubr.f32.mxu0 0.0
    %498 = vmatmul.mubr.f32.gmra.mrb[0].mxu0 %v63
    %v499 = vpop.f32.mrb[0].mxu0
    %v500 = vadd.f32 0.0, %v499
    %v501 = vpop.f32.mrb[0].mxu0
    %v502 = vadd.f32 0.0, %v501
    %503 = vmatprep.mubr.f32.mxu0 0.0
    %504 = vmatmul.mubr.f32.gmra.mrb[0].mxu0 %v64
    %v505 = vpop.f32.mrb[0].mxu0
    %v506 = vadd.f32 0.0, %v505
    %v507 = vpop.f32.mrb[0].mxu0
    %v508 = vadd.f32 0.0, %v507
    %509 = vmatprep.mubr.f32.mxu0 0.0
    %510 = vmatmul.mubr.f32.gmra.mrb[0].mxu0 %v65
    %v511 = vpop.f32.mrb[0].mxu0
    %v512 = vadd.f32 0.0, %v511
    %v513 = vpop.f32.mrb[0].mxu0
    %v514 = vadd.f32 0.0, %v513
    %515 = vmatprep.mubr.f32.mxu0 0.0
    %516 = vmatmul.mubr.f32.gmra.mrb[0].mxu0 %v66
    %v517 = vpop.f32.mrb[0].mxu0
    %v518 = vadd.f32 0.0, %v517
    %v519 = vpop.f32.mrb[0].mxu0
    %v520 = vadd.f32 0.0, %v519
    %521 = vmatprep.mubr.f32.mxu0 0.0
    %522 = vmatmul.mubr.f32.gmra.mrb[0].mxu0 %v67
    %v523 = vpop.f32.mrb[0].mxu0
    %v524 = vadd.f32 0.0, %v523
    %v525 = vpop.f32.mrb[0].mxu0
    %v526 = vadd.f32 0.0, %v525
    %527 = vmatprep.mubr.f32.mxu0 0.0
    %528 = vmatmul.mubr.f32.gmra.mrb[0].mxu0 %v68
    %v529 = vpop.f32.mrb[0].mxu0
    %v530 = vadd.f32 0.0, %v529
    %v531 = vpop.f32.mrb[0].mxu0
    %v532 = vadd.f32 0.0, %v531
    %533 = vdwg.mxu0
    %534 = vmatprep.subr.mxu0 %v72
    %535 = vmatpush1.msra.mxu0 %v71
    %536 = vmatprep.subr.mxu0 %v91
    %537 = vmatpush1.msra.mxu0 %v90
    %538 = vmatprep.subr.mxu0 %v110
    %539 = vmatpush1.msra.mxu0 %v109
    %540 = vmatprep.subr.mxu0 %v129
    %541 = vmatpush1.msra.mxu0 %v128
    %542 = vmatprep.subr.mxu0 %v148
    %543 = vmatpush1.msra.mxu0 %v147
    %544 = vmatprep.subr.mxu0 %v167
    %545 = vmatpush1.msra.mxu0 %v166
    %546 = vmatprep.subr.mxu0 %v186
    %547 = vmatpush1.msra.mxu0 %v185
    %548 = vmatprep.subr.mxu0 %v205
    %549 = vmatpush1.msra.mxu0 %v204
    %550 = vmatprep.subr.mxu0 %v224
    %551 = vmatpush1.msra.mxu0 %v223
    %552 = vmatprep.subr.mxu0 %v243
    %553 = vmatpush1.msra.mxu0 %v242
    %554 = vmatprep.subr.mxu0 %v262
    %555 = vmatpush1.msra.mxu0 %v261
    %556 = vmatprep.subr.mxu0 %v281
    %557 = vmatpush1.msra.mxu0 %v280
    %558 = vmatprep.subr.mxu0 %v300
    %559 = vmatpush1.msra.mxu0 %v299
    %560 = vmatprep.subr.mxu0 %v319
    %561 = vmatpush1.msra.mxu0 %v318
    %562 = vmatprep.subr.mxu0 %v338
    %563 = vmatpush1.msra.mxu0 %v337
    %564 = vmatprep.subr.mxu0 %v357
    %565 = vmatpush1.msra.mxu0 %v356
    %566 = vmatprep.subr.mxu0 0.0
    %567 = vmatpush1.msra.mxu0 0.0
    %568 = vmatprep.subr.mxu0 0.0
    %569 = vmatpush1.msra.mxu0 0.0
    %570 = vmatprep.subr.mxu0 0.0
    %571 = vmatpush1.msra.mxu0 0.0
    %572 = vmatprep.subr.mxu0 0.0
    %573 = vmatpush1.msra.mxu0 0.0
    %574 = vmatprep.subr.mxu0 0.0
    %575 = vmatpush1.msra.mxu0 0.0
    %576 = vmatprep.subr.mxu0 0.0
    %577 = vmatpush1.msra.mxu0 0.0
    %578 = vmatprep.subr.mxu0 0.0
    %579 = vmatpush1.msra.mxu0 0.0
    %580 = vmatprep.subr.mxu0 0.0
    %581 = vmatpush1.msra.mxu0 0.0
    %582 = vmatprep.subr.mxu0 0.0
    %583 = vmatpush1.msra.mxu0 0.0
    %584 = vmatprep.subr.mxu0 0.0
    %585 = vmatpush1.msra.mxu0 0.0
    %586 = vmatprep.subr.mxu0 0.0
    %587 = vmatpush1.msra.mxu0 0.0
    %588 = vmatprep.subr.mxu0 0.0
    %589 = vmatpush1.msra.mxu0 0.0
    %590 = vmatprep.subr.mxu0 0.0
    %591 = vmatpush1.msra.mxu0 0.0
    %592 = vmatprep.subr.mxu0 0.0
    %593 = vmatpush1.msra.mxu0 0.0
    %594 = vmatprep.subr.mxu0 0.0
    %595 = vmatpush1.msra.mxu0 0.0
    %596 = vmatprep.subr.mxu0 0.0
    %597 = vmatpush1.msra.mxu0 0.0
    %598 = vmatprep.mubr.f32.mxu0 0.0
    %599 = vmatmul.mubr.f32.gmra.mrb[0].mxu0 %v53
    %v600 = vpop.f32.mrb[0].mxu0
    %v601 = vadd.f32 0.0, %v600
    %v602 = vpop.f32.mrb[0].mxu0
    %v603 = vadd.f32 0.0, %v602
    %604 = vmatprep.mubr.f32.mxu0 0.0
    %605 = vmatmul.mubr.f32.gmra.mrb[0].mxu0 %v54
    %v606 = vpop.f32.mrb[0].mxu0
    %v607 = vadd.f32 0.0, %v606
    %v608 = vpop.f32.mrb[0].mxu0
    %v609 = vadd.f32 0.0, %v608
    %610 = vmatprep.mubr.f32.mxu0 0.0
    %611 = vmatmul.mubr.f32.gmra.mrb[0].mxu0 %v55
    %v612 = vpop.f32.mrb[0].mxu0
    %v613 = vadd.f32 0.0, %v612
    %v614 = vpop.f32.mrb[0].mxu0
    %v615 = vadd.f32 0.0, %v614
    %616 = vmatprep.mubr.f32.mxu0 0.0
    %617 = vmatmul.mubr.f32.gmra.mrb[0].mxu0 %v56
    %v618 = vpop.f32.mrb[0].mxu0
    %v619 = vadd.f32 0.0, %v618
    %v620 = vpop.f32.mrb[0].mxu0
    %v621 = vadd.f32 0.0, %v620
    %622 = vmatprep.mubr.f32.mxu0 0.0
    %623 = vmatmul.mubr.f32.gmra.mrb[0].mxu0 %v57
    %v624 = vpop.f32.mrb[0].mxu0
    %v625 = vadd.f32 0.0, %v624
    %v626 = vpop.f32.mrb[0].mxu0
    %v627 = vadd.f32 0.0, %v626
    %628 = vmatprep.mubr.f32.mxu0 0.0
    %629 = vmatmul.mubr.f32.gmra.mrb[0].mxu0 %v58
    %v630 = vpop.f32.mrb[0].mxu0
    %v631 = vadd.f32 0.0, %v630
    %v632 = vpop.f32.mrb[0].mxu0
    %v633 = vadd.f32 0.0, %v632
    %634 = vmatprep.mubr.f32.mxu0 0.0
    %635 = vmatmul.mubr.f32.gmra.mrb[0].mxu0 %v59
    %v636 = vpop.f32.mrb[0].mxu0
    %v637 = vadd.f32 0.0, %v636
    %v638 = vpop.f32.mrb[0].mxu0
    %v639 = vadd.f32 0.0, %v638
    %640 = vmatprep.mubr.f32.mxu0 0.0
    %641 = vmatmul.mubr.f32.gmra.mrb[0].mxu0 %v60
    %v642 = vpop.f32.mrb[0].mxu0
    %v643 = vadd.f32 0.0, %v642
    %v644 = vpop.f32.mrb[0].mxu0
    %v645 = vadd.f32 0.0, %v644
    %646 = vmatprep.mubr.f32.mxu0 0.0
    %647 = vmatmul.mubr.f32.gmra.mrb[0].mxu0 %v61
    %v648 = vpop.f32.mrb[0].mxu0
    %v649 = vadd.f32 0.0, %v648
    %v650 = vpop.f32.mrb[0].mxu0
    %v651 = vadd.f32 0.0, %v650
    %652 = vmatprep.mubr.f32.mxu0 0.0
    %653 = vmatmul.mubr.f32.gmra.mrb[0].mxu0 %v62
    %v654 = vpop.f32.mrb[0].mxu0
    %v655 = vadd.f32 0.0, %v654
    %v656 = vpop.f32.mrb[0].mxu0
    %v657 = vadd.f32 0.0, %v656
    %658 = vmatprep.mubr.f32.mxu0 0.0
    %659 = vmatmul.mubr.f32.gmra.mrb[0].mxu0 %v63
    %v660 = vpop.f32.mrb[0].mxu0
    %v661 = vadd.f32 0.0, %v660
    %v662 = vpop.f32.mrb[0].mxu0
    %v663 = vadd.f32 0.0, %v662
    %664 = vmatprep.mubr.f32.mxu0 0.0
    %665 = vmatmul.mubr.f32.gmra.mrb[0].mxu0 %v64
    %v666 = vpop.f32.mrb[0].mxu0
    %v667 = vadd.f32 0.0, %v666
    %v668 = vpop.f32.mrb[0].mxu0
    %v669 = vadd.f32 0.0, %v668
    %670 = vmatprep.mubr.f32.mxu0 0.0
    %671 = vmatmul.mubr.f32.gmra.mrb[0].mxu0 %v65
    %v672 = vpop.f32.mrb[0].mxu0
    %v673 = vadd.f32 0.0, %v672
    %v674 = vpop.f32.mrb[0].mxu0
    %v675 = vadd.f32 0.0, %v674
    %676 = vmatprep.mubr.f32.mxu0 0.0
    %677 = vmatmul.mubr.f32.gmra.mrb[0].mxu0 %v66
    %v678 = vpop.f32.mrb[0].mxu0
    %v679 = vadd.f32 0.0, %v678
    %v680 = vpop.f32.mrb[0].mxu0
    %v681 = vadd.f32 0.0, %v680
    %682 = vmatprep.mubr.f32.mxu0 0.0
    %683 = vmatmul.mubr.f32.gmra.mrb[0].mxu0 %v67
    %v684 = vpop.f32.mrb[0].mxu0
    %v685 = vadd.f32 0.0, %v684
    %v686 = vpop.f32.mrb[0].mxu0
    %v687 = vadd.f32 0.0, %v686
    %688 = vmatprep.mubr.f32.mxu0 0.0
    %689 = vmatmul.mubr.f32.gmra.mrb[0].mxu0 %v68
    %v690 = vpop.f32.mrb[0].mxu0
    %v691 = vadd.f32 0.0, %v690
    %v692 = vpop.f32.mrb[0].mxu0
    %v693 = vadd.f32 0.0, %v692
    %694 = vdwg.mxu0
    %695 = vmatprep.subr.mxu0 %v74
    %696 = vmatpush1.msra.mxu0 %v73
    %697 = vmatprep.subr.mxu0 %v93
    %698 = vmatpush1.msra.mxu0 %v92
    %699 = vmatprep.subr.mxu0 %v112
    %700 = vmatpush1.msra.mxu0 %v111
    %701 = vmatprep.subr.mxu0 %v131
    %702 = vmatpush1.msra.mxu0 %v130
    %703 = vmatprep.subr.mxu0 %v150
    %704 = vmatpush1.msra.mxu0 %v149
    %705 = vmatprep.subr.mxu0 %v169
    %706 = vmatpush1.msra.mxu0 %v168
    %707 = vmatprep.subr.mxu0 %v188
    %708 = vmatpush1.msra.mxu0 %v187
    %709 = vmatprep.subr.mxu0 %v207
    %710 = vmatpush1.msra.mxu0 %v206
    %711 = vmatprep.subr.mxu0 %v226
    %712 = vmatpush1.msra.mxu0 %v225
    %713 = vmatprep.subr.mxu0 %v245
    %714 = vmatpush1.msra.mxu0 %v244
    %715 = vmatprep.subr.mxu0 %v264
    %716 = vmatpush1.msra.mxu0 %v263
    %717 = vmatprep.subr.mxu0 %v283
    %718 = vmatpush1.msra.mxu0 %v282
    %719 = vmatprep.subr.mxu0 %v302
    %720 = vmatpush1.msra.mxu0 %v301
    %721 = vmatprep.subr.mxu0 %v321
    %722 = vmatpush1.msra.mxu0 %v320
    %723 = vmatprep.subr.mxu0 %v340
    %724 = vmatpush1.msra.mxu0 %v339
    %725 = vmatprep.subr.mxu0 %v359
    %726 = vmatpush1.msra.mxu0 %v358
    %727 = vmatprep.subr.mxu0 0.0
    %728 = vmatpush1.msra.mxu0 0.0
    %729 = vmatprep.subr.mxu0 0.0
    %730 = vmatpush1.msra.mxu0 0.0
    %731 = vmatprep.subr.mxu0 0.0
    %732 = vmatpush1.msra.mxu0 0.0
    %733 = vmatprep.subr.mxu0 0.0
    %734 = vmatpush1.msra.mxu0 0.0
    %735 = vmatprep.subr.mxu0 0.0
    %736 = vmatpush1.msra.mxu0 0.0
    %737 = vmatprep.subr.mxu0 0.0
    %738 = vmatpush1.msra.mxu0 0.0
    %739 = vmatprep.subr.mxu0 0.0
    %740 = vmatpush1.msra.mxu0 0.0
    %741 = vmatprep.subr.mxu0 0.0
    %742 = vmatpush1.msra.mxu0 0.0
    %743 = vmatprep.subr.mxu0 0.0
    %744 = vmatpush1.msra.mxu0 0.0
    %745 = vmatprep.subr.mxu0 0.0
    %746 = vmatpush1.msra.mxu0 0.0
    %747 = vmatprep.subr.mxu0 0.0
    %748 = vmatpush1.msra.mxu0 0.0
    %749 = vmatprep.subr.mxu0 0.0
    %750 = vmatpush1.msra.mxu0 0.0
    %751 = vmatprep.subr.mxu0 0.0
    %752 = vmatpush1.msra.mxu0 0.0
    %753 = vmatprep.subr.mxu0 0.0
    %754 = vmatpush1.msra.mxu0 0.0
    %755 = vmatprep.subr.mxu0 0.0
    %756 = vmatpush1.msra.mxu0 0.0
    %757 = vmatprep.subr.mxu0 0.0
    %758 = vmatpush1.msra.mxu0 0.0
    %759 = vmatprep.mubr.f32.mxu0 0.0
    %760 = vmatmul.mubr.f32.gmra.mrb[0].mxu0 %v53
    %v761 = vpop.f32.mrb[0].mxu0
    %v762 = vadd.f32 0.0, %v761
    %v763 = vpop.f32.mrb[0].mxu0
    %v764 = vadd.f32 0.0, %v763
    %765 = vmatprep.mubr.f32.mxu0 0.0
    %766 = vmatmul.mubr.f32.gmra.mrb[0].mxu0 %v54
    %v767 = vpop.f32.mrb[0].mxu0
    %v768 = vadd.f32 0.0, %v767
    %v769 = vpop.f32.mrb[0].mxu0
    %v770 = vadd.f32 0.0, %v769
    %771 = vmatprep.mubr.f32.mxu0 0.0
    %772 = vmatmul.mubr.f32.gmra.mrb[0].mxu0 %v55
    %v773 = vpop.f32.mrb[0].mxu0
    %v774 = vadd.f32 0.0, %v773
    %v775 = vpop.f32.mrb[0].mxu0
    %v776 = vadd.f32 0.0, %v775
    %777 = vmatprep.mubr.f32.mxu0 0.0
    %778 = vmatmul.mubr.f32.gmra.mrb[0].mxu0 %v56
    %v779 = vpop.f32.mrb[0].mxu0
    %v780 = vadd.f32 0.0, %v779
    %v781 = vpop.f32.mrb[0].mxu0
    %v782 = vadd.f32 0.0, %v781
    %783 = vmatprep.mubr.f32.mxu0 0.0
    %784 = vmatmul.mubr.f32.gmra.mrb[0].mxu0 %v57
    %v785 = vpop.f32.mrb[0].mxu0
    %v786 = vadd.f32 0.0, %v785
    %v787 = vpop.f32.mrb[0].mxu0
    %v788 = vadd.f32 0.0, %v787
    %789 = vmatprep.mubr.f32.mxu0 0.0
    %790 = vmatmul.mubr.f32.gmra.mrb[0].mxu0 %v58
    %v791 = vpop.f32.mrb[0].mxu0
    %v792 = vadd.f32 0.0, %v791
    %v793 = vpop.f32.mrb[0].mxu0
    %v794 = vadd.f32 0.0, %v793
    %795 = vmatprep.mubr.f32.mxu0 0.0
    %796 = vmatmul.mubr.f32.gmra.mrb[0].mxu0 %v59
    %v797 = vpop.f32.mrb[0].mxu0
    %v798 = vadd.f32 0.0, %v797
    %v799 = vpop.f32.mrb[0].mxu0
    %v800 = vadd.f32 0.0, %v799
    %801 = vmatprep.mubr.f32.mxu0 0.0
    %802 = vmatmul.mubr.f32.gmra.mrb[0].mxu0 %v60
    %v803 = vpop.f32.mrb[0].mxu0
    %v804 = vadd.f32 0.0, %v803
    %v805 = vpop.f32.mrb[0].mxu0
    %v806 = vadd.f32 0.0, %v805
    %807 = vmatprep.mubr.f32.mxu0 0.0
    %808 = vmatmul.mubr.f32.gmra.mrb[0].mxu0 %v61
    %v809 = vpop.f32.mrb[0].mxu0
    %v810 = vadd.f32 0.0, %v809
    %v811 = vpop.f32.mrb[0].mxu0
    %v812 = vadd.f32 0.0, %v811
    %813 = vmatprep.mubr.f32.mxu0 0.0
    %814 = vmatmul.mubr.f32.gmra.mrb[0].mxu0 %v62
    %v815 = vpop.f32.mrb[0].mxu0
    %v816 = vadd.f32 0.0, %v815
    %v817 = vpop.f32.mrb[0].mxu0
    %v818 = vadd.f32 0.0, %v817
    %819 = vmatprep.mubr.f32.mxu0 0.0
    %820 = vmatmul.mubr.f32.gmra.mrb[0].mxu0 %v63
    %v821 = vpop.f32.mrb[0].mxu0
    %v822 = vadd.f32 0.0, %v821
    %v823 = vpop.f32.mrb[0].mxu0
    %v824 = vadd.f32 0.0, %v823
    %825 = vmatprep.mubr.f32.mxu0 0.0
    %826 = vmatmul.mubr.f32.gmra.mrb[0].mxu0 %v64
    %v827 = vpop.f32.mrb[0].mxu0
    %v828 = vadd.f32 0.0, %v827
    %v829 = vpop.f32.mrb[0].mxu0
    %v830 = vadd.f32 0.0, %v829
    %831 = vmatprep.mubr.f32.mxu0 0.0
    %832 = vmatmul.mubr.f32.gmra.mrb[0].mxu0 %v65
    %v833 = vpop.f32.mrb[0].mxu0
    %v834 = vadd.f32 0.0, %v833
    %v835 = vpop.f32.mrb[0].mxu0
    %v836 = vadd.f32 0.0, %v835
    %837 = vmatprep.mubr.f32.mxu0 0.0
    %838 = vmatmul.mubr.f32.gmra.mrb[0].mxu0 %v66
    %v839 = vpop.f32.mrb[0].mxu0
    %v840 = vadd.f32 0.0, %v839
    %v841 = vpop.f32.mrb[0].mxu0
    %v842 = vadd.f32 0.0, %v841
    %843 = vmatprep.mubr.f32.mxu0 0.0
    %844 = vmatmul.mubr.f32.gmra.mrb[0].mxu0 %v67
    %v845 = vpop.f32.mrb[0].mxu0
    %v846 = vadd.f32 0.0, %v845
    %v847 = vpop.f32.mrb[0].mxu0
    %v848 = vadd.f32 0.0, %v847
    %849 = vmatprep.mubr.f32.mxu0 0.0
    %850 = vmatmul.mubr.f32.gmra.mrb[0].mxu0 %v68
    %v851 = vpop.f32.mrb[0].mxu0
    %v852 = vadd.f32 0.0, %v851
    %v853 = vpop.f32.mrb[0].mxu0
    %v854 = vadd.f32 0.0, %v853
    %855 = vdwg.mxu0
    %856 = vmatprep.subr.mxu0 %v76
    %857 = vmatpush1.msra.mxu0 %v75
    %858 = vmatprep.subr.mxu0 %v95
    %859 = vmatpush1.msra.mxu0 %v94
    %860 = vmatprep.subr.mxu0 %v114
    %861 = vmatpush1.msra.mxu0 %v113
    %862 = vmatprep.subr.mxu0 %v133
    %863 = vmatpush1.msra.mxu0 %v132
    %864 = vmatprep.subr.mxu0 %v152
    %865 = vmatpush1.msra.mxu0 %v151
    %866 = vmatprep.subr.mxu0 %v171
    %867 = vmatpush1.msra.mxu0 %v170
    %868 = vmatprep.subr.mxu0 %v190
    %869 = vmatpush1.msra.mxu0 %v189
    %870 = vmatprep.subr.mxu0 %v209
    %871 = vmatpush1.msra.mxu0 %v208
    %872 = vmatprep.subr.mxu0 %v228
    %873 = vmatpush1.msra.mxu0 %v227
    %874 = vmatprep.subr.mxu0 %v247
    %875 = vmatpush1.msra.mxu0 %v246
    %876 = vmatprep.subr.mxu0 %v266
    %877 = vmatpush1.msra.mxu0 %v265
    %878 = vmatprep.subr.mxu0 %v285
    %879 = vmatpush1.msra.mxu0 %v284
    %880 = vmatprep.subr.mxu0 %v304
    %881 = vmatpush1.msra.mxu0 %v303
    %882 = vmatprep.subr.mxu0 %v323
    %883 = vmatpush1.msra.mxu0 %v322
    %884 = vmatprep.subr.mxu0 %v342
    %885 = vmatpush1.msra.mxu0 %v341
    %886 = vmatprep.subr.mxu0 %v361
    %887 = vmatpush1.msra.mxu0 %v360
    %888 = vmatprep.subr.mxu0 0.0
    %889 = vmatpush1.msra.mxu0 0.0
    %890 = vmatprep.subr.mxu0 0.0
    %891 = vmatpush1.msra.mxu0 0.0
    %892 = vmatprep.subr.mxu0 0.0
    %893 = vmatpush1.msra.mxu0 0.0
    %894 = vmatprep.subr.mxu0 0.0
    %895 = vmatpush1.msra.mxu0 0.0
    %896 = vmatprep.subr.mxu0 0.0
    %897 = vmatpush1.msra.mxu0 0.0
    %898 = vmatprep.subr.mxu0 0.0
    %899 = vmatpush1.msra.mxu0 0.0
    %900 = vmatprep.subr.mxu0 0.0
    %901 = vmatpush1.msra.mxu0 0.0
    %902 = vmatprep.subr.mxu0 0.0
    %903 = vmatpush1.msra.mxu0 0.0
    %904 = vmatprep.subr.mxu0 0.0
    %905 = vmatpush1.msra.mxu0 0.0
    %906 = vmatprep.subr.mxu0 0.0
    %907 = vmatpush1.msra.mxu0 0.0
    %908 = vmatprep.subr.mxu0 0.0
    %909 = vmatpush1.msra.mxu0 0.0
    %910 = vmatprep.subr.mxu0 0.0
    %911 = vmatpush1.msra.mxu0 0.0
    %912 = vmatprep.subr.mxu0 0.0
    %913 = vmatpush1.msra.mxu0 0.0
    %914 = vmatprep.subr.mxu0 0.0
    %915 = vmatpush1.msra.mxu0 0.0
    %916 = vmatprep.subr.mxu0 0.0
    %917 = vmatpush1.msra.mxu0 0.0
    %918 = vmatprep.subr.mxu0 0.0
    %919 = vmatpush1.msra.mxu0 0.0
    %920 = vmatprep.mubr.f32.mxu0 0.0
    %921 = vmatmul.mubr.f32.gmra.mrb[0].mxu0 %v53
    %v922 = vpop.f32.mrb[0].mxu0
    %v923 = vadd.f32 0.0, %v922
    %v924 = vpop.f32.mrb[0].mxu0
    %v925 = vadd.f32 0.0, %v924
    %926 = vmatprep.mubr.f32.mxu0 0.0
    %927 = vmatmul.mubr.f32.gmra.mrb[0].mxu0 %v54
    %v928 = vpop.f32.mrb[0].mxu0
    %v929 = vadd.f32 0.0, %v928
    %v930 = vpop.f32.mrb[0].mxu0
    %v931 = vadd.f32 0.0, %v930
    %932 = vmatprep.mubr.f32.mxu0 0.0
    %933 = vmatmul.mubr.f32.gmra.mrb[0].mxu0 %v55
    %v934 = vpop.f32.mrb[0].mxu0
    %v935 = vadd.f32 0.0, %v934
    %v936 = vpop.f32.mrb[0].mxu0
    %v937 = vadd.f32 0.0, %v936
    %938 = vmatprep.mubr.f32.mxu0 0.0
    %939 = vmatmul.mubr.f32.gmra.mrb[0].mxu0 %v56
    %v940 = vpop.f32.mrb[0].mxu0
    %v941 = vadd.f32 0.0, %v940
    %v942 = vpop.f32.mrb[0].mxu0
    %v943 = vadd.f32 0.0, %v942
    %944 = vmatprep.mubr.f32.mxu0 0.0
    %945 = vmatmul.mubr.f32.gmra.mrb[0].mxu0 %v57
    %v946 = vpop.f32.mrb[0].mxu0
    %v947 = vadd.f32 0.0, %v946
    %v948 = vpop.f32.mrb[0].mxu0
    %v949 = vadd.f32 0.0, %v948
    %950 = vmatprep.mubr.f32.mxu0 0.0
    %951 = vmatmul.mubr.f32.gmra.mrb[0].mxu0 %v58
    %v952 = vpop.f32.mrb[0].mxu0
    %v953 = vadd.f32 0.0, %v952
    %v954 = vpop.f32.mrb[0].mxu0
    %v955 = vadd.f32 0.0, %v954
    %956 = vmatprep.mubr.f32.mxu0 0.0
    %957 = vmatmul.mubr.f32.gmra.mrb[0].mxu0 %v59
    %v958 = vpop.f32.mrb[0].mxu0
    %v959 = vadd.f32 0.0, %v958
    %v960 = vpop.f32.mrb[0].mxu0
    %v961 = vadd.f32 0.0, %v960
    %962 = vmatprep.mubr.f32.mxu0 0.0
    %963 = vmatmul.mubr.f32.gmra.mrb[0].mxu0 %v60
    %v964 = vpop.f32.mrb[0].mxu0
    %v965 = vadd.f32 0.0, %v964
    %v966 = vpop.f32.mrb[0].mxu0
    %v967 = vadd.f32 0.0, %v966
    %968 = vmatprep.mubr.f32.mxu0 0.0
    %969 = vmatmul.mubr.f32.gmra.mrb[0].mxu0 %v61
    %v970 = vpop.f32.mrb[0].mxu0
    %v971 = vadd.f32 0.0, %v970
    %v972 = vpop.f32.mrb[0].mxu0
    %v973 = vadd.f32 0.0, %v972
    %974 = vmatprep.mubr.f32.mxu0 0.0
    %975 = vmatmul.mubr.f32.gmra.mrb[0].mxu0 %v62
    %v976 = vpop.f32.mrb[0].mxu0
    %v977 = vadd.f32 0.0, %v976
    %v978 = vpop.f32.mrb[0].mxu0
    %v979 = vadd.f32 0.0, %v978
    %980 = vmatprep.mubr.f32.mxu0 0.0
    %981 = vmatmul.mubr.f32.gmra.mrb[0].mxu0 %v63
    %v982 = vpop.f32.mrb[0].mxu0
    %v983 = vadd.f32 0.0, %v982
    %v984 = vpop.f32.mrb[0].mxu0
    %v985 = vadd.f32 0.0, %v984
    %986 = vmatprep.mubr.f32.mxu0 0.0
    %987 = vmatmul.mubr.f32.gmra.mrb[0].mxu0 %v64
    %v988 = vpop.f32.mrb[0].mxu0
    %v989 = vadd.f32 0.0, %v988
    %v990 = vpop.f32.mrb[0].mxu0
    %v991 = vadd.f32 0.0, %v990
    %992 = vmatprep.mubr.f32.mxu0 0.0
    %993 = vmatmul.mubr.f32.gmra.mrb[0].mxu0 %v65
    %v994 = vpop.f32.mrb[0].mxu0
    %v995 = vadd.f32 0.0, %v994
    %v996 = vpop.f32.mrb[0].mxu0
    %v997 = vadd.f32 0.0, %v996
    %998 = vmatprep.mubr.f32.mxu0 0.0
    %999 = vmatmul.mubr.f32.gmra.mrb[0].mxu0 %v66
    %v1000 = vpop.f32.mrb[0].mxu0
    %v1001 = vadd.f32 0.0, %v1000
    %v1002 = vpop.f32.mrb[0].mxu0
    %v1003 = vadd.f32 0.0, %v1002
    %1004 = vmatprep.mubr.f32.mxu0 0.0
    %1005 = vmatmul.mubr.f32.gmra.mrb[0].mxu0 %v67
    %v1006 = vpop.f32.mrb[0].mxu0
    %v1007 = vadd.f32 0.0, %v1006
    %v1008 = vpop.f32.mrb[0].mxu0
    %v1009 = vadd.f32 0.0, %v1008
    %1010 = vmatprep.mubr.f32.mxu0 0.0
    %1011 = vmatmul.mubr.f32.gmra.mrb[0].mxu0 %v68
    %v1012 = vpop.f32.mrb[0].mxu0
    %v1013 = vadd.f32 0.0, %v1012
    %v1014 = vpop.f32.mrb[0].mxu0
    %v1015 = vadd.f32 0.0, %v1014
    %1016 = vdwg.mxu0
    %1017 = vmatprep.subr.mxu0 %v78
    %1018 = vmatpush1.msra.mxu0 %v77
    %1019 = vmatprep.subr.mxu0 %v97
    %1020 = vmatpush1.msra.mxu0 %v96
    %1021 = vmatprep.subr.mxu0 %v116
    %1022 = vmatpush1.msra.mxu0 %v115
    %1023 = vmatprep.subr.mxu0 %v135
    %1024 = vmatpush1.msra.mxu0 %v134
    %1025 = vmatprep.subr.mxu0 %v154
    %1026 = vmatpush1.msra.mxu0 %v153
    %1027 = vmatprep.subr.mxu0 %v173
    %1028 = vmatpush1.msra.mxu0 %v172
    %1029 = vmatprep.subr.mxu0 %v192
    %1030 = vmatpush1.msra.mxu0 %v191
    %1031 = vmatprep.subr.mxu0 %v211
    %1032 = vmatpush1.msra.mxu0 %v210
    %1033 = vmatprep.subr.mxu0 %v230
    %1034 = vmatpush1.msra.mxu0 %v229
    %1035 = vmatprep.subr.mxu0 %v249
    %1036 = vmatpush1.msra.mxu0 %v248
    %1037 = vmatprep.subr.mxu0 %v268
    %1038 = vmatpush1.msra.mxu0 %v267
    %1039 = vmatprep.subr.mxu0 %v287
    %1040 = vmatpush1.msra.mxu0 %v286
    %1041 = vmatprep.subr.mxu0 %v306
    %1042 = vmatpush1.msra.mxu0 %v305
    %1043 = vmatprep.subr.mxu0 %v325
    %1044 = vmatpush1.msra.mxu0 %v324
    %1045 = vmatprep.subr.mxu0 %v344
    %1046 = vmatpush1.msra.mxu0 %v343
    %1047 = vmatprep.subr.mxu0 %v363
    %1048 = vmatpush1.msra.mxu0 %v362
    %1049 = vmatprep.subr.mxu0 0.0
    %1050 = vmatpush1.msra.mxu0 0.0
    %1051 = vmatprep.subr.mxu0 0.0
    %1052 = vmatpush1.msra.mxu0 0.0
    %1053 = vmatprep.subr.mxu0 0.0
    %1054 = vmatpush1.msra.mxu0 0.0
    %1055 = vmatprep.subr.mxu0 0.0
    %1056 = vmatpush1.msra.mxu0 0.0
    %1057 = vmatprep.subr.mxu0 0.0
    %1058 = vmatpush1.msra.mxu0 0.0
    %1059 = vmatprep.subr.mxu0 0.0
    %1060 = vmatpush1.msra.mxu0 0.0
    %1061 = vmatprep.subr.mxu0 0.0
    %1062 = vmatpush1.msra.mxu0 0.0
    %1063 = vmatprep.subr.mxu0 0.0
    %1064 = vmatpush1.msra.mxu0 0.0
    %1065 = vmatprep.subr.mxu0 0.0
    %1066 = vmatpush1.msra.mxu0 0.0
    %1067 = vmatprep.subr.mxu0 0.0
    %1068 = vmatpush1.msra.mxu0 0.0
    %1069 = vmatprep.subr.mxu0 0.0
    %1070 = vmatpush1.msra.mxu0 0.0
    %1071 = vmatprep.subr.mxu0 0.0
    %1072 = vmatpush1.msra.mxu0 0.0
    %1073 = vmatprep.subr.mxu0 0.0
    %1074 = vmatpush1.msra.mxu0 0.0
    %1075 = vmatprep.subr.mxu0 0.0
    %1076 = vmatpush1.msra.mxu0 0.0
    %1077 = vmatprep.subr.mxu0 0.0
    %1078 = vmatpush1.msra.mxu0 0.0
    %1079 = vmatprep.subr.mxu0 0.0
    %1080 = vmatpush1.msra.mxu0 0.0
    %1081 = vmatprep.mubr.f32.mxu0 0.0
    %1082 = vmatmul.mubr.f32.gmra.mrb[0].mxu0 %v53
    %v1083 = vpop.f32.mrb[0].mxu0
    %v1084 = vadd.f32 0.0, %v1083
    %v1085 = vpop.f32.mrb[0].mxu0
    %v1086 = vadd.f32 0.0, %v1085
    %1087 = vmatprep.mubr.f32.mxu0 0.0
    %1088 = vmatmul.mubr.f32.gmra.mrb[0].mxu0 %v54
    %v1089 = vpop.f32.mrb[0].mxu0
    %v1090 = vadd.f32 0.0, %v1089
    %v1091 = vpop.f32.mrb[0].mxu0
    %v1092 = vadd.f32 0.0, %v1091
    %1093 = vmatprep.mubr.f32.mxu0 0.0
    %1094 = vmatmul.mubr.f32.gmra.mrb[0].mxu0 %v55
    %v1095 = vpop.f32.mrb[0].mxu0
    %v1096 = vadd.f32 0.0, %v1095
    %v1097 = vpop.f32.mrb[0].mxu0
    %v1098 = vadd.f32 0.0, %v1097
    %1099 = vmatprep.mubr.f32.mxu0 0.0
    %1100 = vmatmul.mubr.f32.gmra.mrb[0].mxu0 %v56
    %v1101 = vpop.f32.mrb[0].mxu0
    %v1102 = vadd.f32 0.0, %v1101
    %v1103 = vpop.f32.mrb[0].mxu0
    %v1104 = vadd.f32 0.0, %v1103
    %1105 = vmatprep.mubr.f32.mxu0 0.0
    %1106 = vmatmul.mubr.f32.gmra.mrb[0].mxu0 %v57
    %v1107 = vpop.f32.mrb[0].mxu0
    %v1108 = vadd.f32 0.0, %v1107
    %v1109 = vpop.f32.mrb[0].mxu0
    %v1110 = vadd.f32 0.0, %v1109
    %1111 = vmatprep.mubr.f32.mxu0 0.0
    %1112 = vmatmul.mubr.f32.gmra.mrb[0].mxu0 %v58
    %v1113 = vpop.f32.mrb[0].mxu0
    %v1114 = vadd.f32 0.0, %v1113
    %v1115 = vpop.f32.mrb[0].mxu0
    %v1116 = vadd.f32 0.0, %v1115
    %1117 = vmatprep.mubr.f32.mxu0 0.0
    %1118 = vmatmul.mubr.f32.gmra.mrb[0].mxu0 %v59
    %v1119 = vpop.f32.mrb[0].mxu0
    %v1120 = vadd.f32 0.0, %v1119
    %v1121 = vpop.f32.mrb[0].mxu0
    %v1122 = vadd.f32 0.0, %v1121
    %1123 = vmatprep.mubr.f32.mxu0 0.0
    %1124 = vmatmul.mubr.f32.gmra.mrb[0].mxu0 %v60
    %v1125 = vpop.f32.mrb[0].mxu0
    %v1126 = vadd.f32 0.0, %v1125
    %v1127 = vpop.f32.mrb[0].mxu0
    %v1128 = vadd.f32 0.0, %v1127
    %1129 = vmatprep.mubr.f32.mxu0 0.0
    %1130 = vmatmul.mubr.f32.gmra.mrb[0].mxu0 %v61
    %v1131 = vpop.f32.mrb[0].mxu0
    %v1132 = vadd.f32 0.0, %v1131
    %v1133 = vpop.f32.mrb[0].mxu0
    %v1134 = vadd.f32 0.0, %v1133
    %1135 = vmatprep.mubr.f32.mxu0 0.0
    %1136 = vmatmul.mubr.f32.gmra.mrb[0].mxu0 %v62
    %v1137 = vpop.f32.mrb[0].mxu0
    %v1138 = vadd.f32 0.0, %v1137
    %v1139 = vpop.f32.mrb[0].mxu0
    %v1140 = vadd.f32 0.0, %v1139
    %1141 = vmatprep.mubr.f32.mxu0 0.0
    %1142 = vmatmul.mubr.f32.gmra.mrb[0].mxu0 %v63
    %v1143 = vpop.f32.mrb[0].mxu0
    %v1144 = vadd.f32 0.0, %v1143
    %v1145 = vpop.f32.mrb[0].mxu0
    %v1146 = vadd.f32 0.0, %v1145
    %1147 = vmatprep.mubr.f32.mxu0 0.0
    %1148 = vmatmul.mubr.f32.gmra.mrb[0].mxu0 %v64
    %v1149 = vpop.f32.mrb[0].mxu0
    %v1150 = vadd.f32 0.0, %v1149
    %v1151 = vpop.f32.mrb[0].mxu0
    %v1152 = vadd.f32 0.0, %v1151
    %1153 = vmatprep.mubr.f32.mxu0 0.0
    %1154 = vmatmul.mubr.f32.gmra.mrb[0].mxu0 %v65
    %v1155 = vpop.f32.mrb[0].mxu0
    %v1156 = vadd.f32 0.0, %v1155
    %v1157 = vpop.f32.mrb[0].mxu0
    %v1158 = vadd.f32 0.0, %v1157
    %1159 = vmatprep.mubr.f32.mxu0 0.0
    %1160 = vmatmul.mubr.f32.gmra.mrb[0].mxu0 %v66
    %v1161 = vpop.f32.mrb[0].mxu0
    %v1162 = vadd.f32 0.0, %v1161
    %v1163 = vpop.f32.mrb[0].mxu0
    %v1164 = vadd.f32 0.0, %v1163
    %1165 = vmatprep.mubr.f32.mxu0 0.0
    %1166 = vmatmul.mubr.f32.gmra.mrb[0].mxu0 %v67
    %v1167 = vpop.f32.mrb[0].mxu0
    %v1168 = vadd.f32 0.0, %v1167
    %v1169 = vpop.f32.mrb[0].mxu0
    %v1170 = vadd.f32 0.0, %v1169
    %1171 = vmatprep.mubr.f32.mxu0 0.0
    %1172 = vmatmul.mubr.f32.gmra.mrb[0].mxu0 %v68
    %v1173 = vpop.f32.mrb[0].mxu0
    %v1174 = vadd.f32 0.0, %v1173
    %v1175 = vpop.f32.mrb[0].mxu0
    %v1176 = vadd.f32 0.0, %v1175
    %1177 = vdwg.mxu0
    %1178 = vmatprep.subr.mxu0 %v80
    %1179 = vmatpush1.msra.mxu0 %v79
    %1180 = vmatprep.subr.mxu0 %v99
    %1181 = vmatpush1.msra.mxu0 %v98
    %1182 = vmatprep.subr.mxu0 %v118
    %1183 = vmatpush1.msra.mxu0 %v117
    %1184 = vmatprep.subr.mxu0 %v137
    %1185 = vmatpush1.msra.mxu0 %v136
    %1186 = vmatprep.subr.mxu0 %v156
    %1187 = vmatpush1.msra.mxu0 %v155
    %1188 = vmatprep.subr.mxu0 %v175
    %1189 = vmatpush1.msra.mxu0 %v174
    %1190 = vmatprep.subr.mxu0 %v194
    %1191 = vmatpush1.msra.mxu0 %v193
    %1192 = vmatprep.subr.mxu0 %v213
    %1193 = vmatpush1.msra.mxu0 %v212
    %1194 = vmatprep.subr.mxu0 %v232
    %1195 = vmatpush1.msra.mxu0 %v231
    %1196 = vmatprep.subr.mxu0 %v251
    %1197 = vmatpush1.msra.mxu0 %v250
    %1198 = vmatprep.subr.mxu0 %v270
    %1199 = vmatpush1.msra.mxu0 %v269
    %1200 = vmatprep.subr.mxu0 %v289
    %1201 = vmatpush1.msra.mxu0 %v288
    %1202 = vmatprep.subr.mxu0 %v308
    %1203 = vmatpush1.msra.mxu0 %v307
    %1204 = vmatprep.subr.mxu0 %v327
    %1205 = vmatpush1.msra.mxu0 %v326
    %1206 = vmatprep.subr.mxu0 %v346
    %1207 = vmatpush1.msra.mxu0 %v345
    %1208 = vmatprep.subr.mxu0 %v365
    %1209 = vmatpush1.msra.mxu0 %v364
    %1210 = vmatprep.subr.mxu0 0.0
    %1211 = vmatpush1.msra.mxu0 0.0
    %1212 = vmatprep.subr.mxu0 0.0
    %1213 = vmatpush1.msra.mxu0 0.0
    %1214 = vmatprep.subr.mxu0 0.0
    %1215 = vmatpush1.msra.mxu0 0.0
    %1216 = vmatprep.subr.mxu0 0.0
    %1217 = vmatpush1.msra.mxu0 0.0
    %1218 = vmatprep.subr.mxu0 0.0
    %1219 = vmatpush1.msra.mxu0 0.0
    %1220 = vmatprep.subr.mxu0 0.0
    %1221 = vmatpush1.msra.mxu0 0.0
    %1222 = vmatprep.subr.mxu0 0.0
    %1223 = vmatpush1.msra.mxu0 0.0
    %1224 = vmatprep.subr.mxu0 0.0
    %1225 = vmatpush1.msra.mxu0 0.0
    %1226 = vmatprep.subr.mxu0 0.0
    %1227 = vmatpush1.msra.mxu0 0.0
    %1228 = vmatprep.subr.mxu0 0.0
    %1229 = vmatpush1.msra.mxu0 0.0
    %1230 = vmatprep.subr.mxu0 0.0
    %1231 = vmatpush1.msra.mxu0 0.0
    %1232 = vmatprep.subr.mxu0 0.0
    %1233 = vmatpush1.msra.mxu0 0.0
    %1234 = vmatprep.subr.mxu0 0.0
    %1235 = vmatpush1.msra.mxu0 0.0
    %1236 = vmatprep.subr.mxu0 0.0
    %1237 = vmatpush1.msra.mxu0 0.0
    %1238 = vmatprep.subr.mxu0 0.0
    %1239 = vmatpush1.msra.mxu0 0.0
    %1240 = vmatprep.subr.mxu0 0.0
    %1241 = vmatpush1.msra.mxu0 0.0
    %1242 = vmatprep.mubr.f32.mxu0 0.0
    %1243 = vmatmul.mubr.f32.gmra.mrb[0].mxu0 %v53
    %v1244 = vpop.f32.mrb[0].mxu0
    %v1245 = vadd.f32 0.0, %v1244
    %v1246 = vpop.f32.mrb[0].mxu0
    %v1247 = vadd.f32 0.0, %v1246
    %1248 = vmatprep.mubr.f32.mxu0 0.0
    %1249 = vmatmul.mubr.f32.gmra.mrb[0].mxu0 %v54
    %v1250 = vpop.f32.mrb[0].mxu0
    %v1251 = vadd.f32 0.0, %v1250
    %v1252 = vpop.f32.mrb[0].mxu0
    %v1253 = vadd.f32 0.0, %v1252
    %1254 = vmatprep.mubr.f32.mxu0 0.0
    %1255 = vmatmul.mubr.f32.gmra.mrb[0].mxu0 %v55
    %v1256 = vpop.f32.mrb[0].mxu0
    %v1257 = vadd.f32 0.0, %v1256
    %v1258 = vpop.f32.mrb[0].mxu0
    %v1259 = vadd.f32 0.0, %v1258
    %1260 = vmatprep.mubr.f32.mxu0 0.0
    %1261 = vmatmul.mubr.f32.gmra.mrb[0].mxu0 %v56
    %v1262 = vpop.f32.mrb[0].mxu0
    %v1263 = vadd.f32 0.0, %v1262
    %v1264 = vpop.f32.mrb[0].mxu0
    %v1265 = vadd.f32 0.0, %v1264
    %1266 = vmatprep.mubr.f32.mxu0 0.0
    %1267 = vmatmul.mubr.f32.gmra.mrb[0].mxu0 %v57
    %v1268 = vpop.f32.mrb[0].mxu0
    %v1269 = vadd.f32 0.0, %v1268
    %v1270 = vpop.f32.mrb[0].mxu0
    %v1271 = vadd.f32 0.0, %v1270
    %1272 = vmatprep.mubr.f32.mxu0 0.0
    %1273 = vmatmul.mubr.f32.gmra.mrb[0].mxu0 %v58
    %v1274 = vpop.f32.mrb[0].mxu0
    %v1275 = vadd.f32 0.0, %v1274
    %v1276 = vpop.f32.mrb[0].mxu0
    %v1277 = vadd.f32 0.0, %v1276
    %1278 = vmatprep.mubr.f32.mxu0 0.0
    %1279 = vmatmul.mubr.f32.gmra.mrb[0].mxu0 %v59
    %v1280 = vpop.f32.mrb[0].mxu0
    %v1281 = vadd.f32 0.0, %v1280
    %v1282 = vpop.f32.mrb[0].mxu0
    %v1283 = vadd.f32 0.0, %v1282
    %1284 = vmatprep.mubr.f32.mxu0 0.0
    %1285 = vmatmul.mubr.f32.gmra.mrb[0].mxu0 %v60
    %v1286 = vpop.f32.mrb[0].mxu0
    %v1287 = vadd.f32 0.0, %v1286
    %v1288 = vpop.f32.mrb[0].mxu0
    %v1289 = vadd.f32 0.0, %v1288
    %1290 = vmatprep.mubr.f32.mxu0 0.0
    %1291 = vmatmul.mubr.f32.gmra.mrb[0].mxu0 %v61
    %v1292 = vpop.f32.mrb[0].mxu0
    %v1293 = vadd.f32 0.0, %v1292
    %v1294 = vpop.f32.mrb[0].mxu0
    %v1295 = vadd.f32 0.0, %v1294
    %1296 = vmatprep.mubr.f32.mxu0 0.0
    %1297 = vmatmul.mubr.f32.gmra.mrb[0].mxu0 %v62
    %v1298 = vpop.f32.mrb[0].mxu0
    %v1299 = vadd.f32 0.0, %v1298
    %v1300 = vpop.f32.mrb[0].mxu0
    %v1301 = vadd.f32 0.0, %v1300
    %1302 = vmatprep.mubr.f32.mxu0 0.0
    %1303 = vmatmul.mubr.f32.gmra.mrb[0].mxu0 %v63
    %v1304 = vpop.f32.mrb[0].mxu0
    %v1305 = vadd.f32 0.0, %v1304
    %v1306 = vpop.f32.mrb[0].mxu0
    %v1307 = vadd.f32 0.0, %v1306
    %1308 = vmatprep.mubr.f32.mxu0 0.0
    %1309 = vmatmul.mubr.f32.gmra.mrb[0].mxu0 %v64
    %v1310 = vpop.f32.mrb[0].mxu0
    %v1311 = vadd.f32 0.0, %v1310
    %v1312 = vpop.f32.mrb[0].mxu0
    %v1313 = vadd.f32 0.0, %v1312
    %1314 = vmatprep.mubr.f32.mxu0 0.0
    %1315 = vmatmul.mubr.f32.gmra.mrb[0].mxu0 %v65
    %v1316 = vpop.f32.mrb[0].mxu0
    %v1317 = vadd.f32 0.0, %v1316
    %v1318 = vpop.f32.mrb[0].mxu0
    %v1319 = vadd.f32 0.0, %v1318
    %1320 = vmatprep.mubr.f32.mxu0 0.0
    %1321 = vmatmul.mubr.f32.gmra.mrb[0].mxu0 %v66
    %v1322 = vpop.f32.mrb[0].mxu0
    %v1323 = vadd.f32 0.0, %v1322
    %v1324 = vpop.f32.mrb[0].mxu0
    %v1325 = vadd.f32 0.0, %v1324
    %1326 = vmatprep.mubr.f32.mxu0 0.0
    %1327 = vmatmul.mubr.f32.gmra.mrb[0].mxu0 %v67
    %v1328 = vpop.f32.mrb[0].mxu0
    %v1329 = vadd.f32 0.0, %v1328
    %v1330 = vpop.f32.mrb[0].mxu0
    %v1331 = vadd.f32 0.0, %v1330
    %1332 = vmatprep.mubr.f32.mxu0 0.0
    %1333 = vmatmul.mubr.f32.gmra.mrb[0].mxu0 %v68
    %v1334 = vpop.f32.mrb[0].mxu0
    %v1335 = vadd.f32 0.0, %v1334
    %v1336 = vpop.f32.mrb[0].mxu0
    %v1337 = vadd.f32 0.0, %v1336
    %1338 = vdwg.mxu0
    %1339 = vmatprep.subr.mxu0 %v82
    %1340 = vmatpush1.msra.mxu0 %v81
    %1341 = vmatprep.subr.mxu0 %v101
    %1342 = vmatpush1.msra.mxu0 %v100
    %1343 = vmatprep.subr.mxu0 %v120
    %1344 = vmatpush1.msra.mxu0 %v119
    %1345 = vmatprep.subr.mxu0 %v139
    %1346 = vmatpush1.msra.mxu0 %v138
    %1347 = vmatprep.subr.mxu0 %v158
    %1348 = vmatpush1.msra.mxu0 %v157
    %1349 = vmatprep.subr.mxu0 %v177
    %1350 = vmatpush1.msra.mxu0 %v176
    %1351 = vmatprep.subr.mxu0 %v196
    %1352 = vmatpush1.msra.mxu0 %v195
    %1353 = vmatprep.subr.mxu0 %v215
    %1354 = vmatpush1.msra.mxu0 %v214
    %1355 = vmatprep.subr.mxu0 %v234
    %1356 = vmatpush1.msra.mxu0 %v233
    %1357 = vmatprep.subr.mxu0 %v253
    %1358 = vmatpush1.msra.mxu0 %v252
    %1359 = vmatprep.subr.mxu0 %v272
    %1360 = vmatpush1.msra.mxu0 %v271
    %1361 = vmatprep.subr.mxu0 %v291
    %1362 = vmatpush1.msra.mxu0 %v290
    %1363 = vmatprep.subr.mxu0 %v310
    %1364 = vmatpush1.msra.mxu0 %v309
    %1365 = vmatprep.subr.mxu0 %v329
    %1366 = vmatpush1.msra.mxu0 %v328
    %1367 = vmatprep.subr.mxu0 %v348
    %1368 = vmatpush1.msra.mxu0 %v347
    %1369 = vmatprep.subr.mxu0 %v367
    %1370 = vmatpush1.msra.mxu0 %v366
    %1371 = vmatprep.subr.mxu0 0.0
    %1372 = vmatpush1.msra.mxu0 0.0
    %1373 = vmatprep.subr.mxu0 0.0
    %1374 = vmatpush1.msra.mxu0 0.0
    %1375 = vmatprep.subr.mxu0 0.0
    %1376 = vmatpush1.msra.mxu0 0.0
    %1377 = vmatprep.subr.mxu0 0.0
    %1378 = vmatpush1.msra.mxu0 0.0
    %1379 = vmatprep.subr.mxu0 0.0
    %1380 = vmatpush1.msra.mxu0 0.0
    %1381 = vmatprep.subr.mxu0 0.0
    %1382 = vmatpush1.msra.mxu0 0.0
    %1383 = vmatprep.subr.mxu0 0.0
    %1384 = vmatpush1.msra.mxu0 0.0
    %1385 = vmatprep.subr.mxu0 0.0
    %1386 = vmatpush1.msra.mxu0 0.0
    %1387 = vmatprep.subr.mxu0 0.0
    %1388 = vmatpush1.msra.mxu0 0.0
    %1389 = vmatprep.subr.mxu0 0.0
    %1390 = vmatpush1.msra.mxu0 0.0
    %1391 = vmatprep.subr.mxu0 0.0
    %1392 = vmatpush1.msra.mxu0 0.0
    %1393 = vmatprep.subr.mxu0 0.0
    %1394 = vmatpush1.msra.mxu0 0.0
    %1395 = vmatprep.subr.mxu0 0.0
    %1396 = vmatpush1.msra.mxu0 0.0
    %1397 = vmatprep.subr.mxu0 0.0
    %1398 = vmatpush1.msra.mxu0 0.0
    %1399 = vmatprep.subr.mxu0 0.0
    %1400 = vmatpush1.msra.mxu0 0.0
    %1401 = vmatprep.subr.mxu0 0.0
    %1402 = vmatpush1.msra.mxu0 0.0
    %1403 = vmatprep.mubr.f32.mxu0 0.0
    %1404 = vmatmul.mubr.f32.gmra.mrb[0].mxu0 %v53
    %v1405 = vpop.f32.mrb[0].mxu0
    %v1406 = vadd.f32 0.0, %v1405
    %v1407 = vpop.f32.mrb[0].mxu0
    %v1408 = vadd.f32 0.0, %v1407
    %1409 = vmatprep.mubr.f32.mxu0 0.0
    %1410 = vmatmul.mubr.f32.gmra.mrb[0].mxu0 %v54
    %v1411 = vpop.f32.mrb[0].mxu0
    %v1412 = vadd.f32 0.0, %v1411
    %v1413 = vpop.f32.mrb[0].mxu0
    %v1414 = vadd.f32 0.0, %v1413
    %1415 = vmatprep.mubr.f32.mxu0 0.0
    %1416 = vmatmul.mubr.f32.gmra.mrb[0].mxu0 %v55
    %v1417 = vpop.f32.mrb[0].mxu0
    %v1418 = vadd.f32 0.0, %v1417
    %v1419 = vpop.f32.mrb[0].mxu0
    %v1420 = vadd.f32 0.0, %v1419
    %1421 = vmatprep.mubr.f32.mxu0 0.0
    %1422 = vmatmul.mubr.f32.gmra.mrb[0].mxu0 %v56
    %v1423 = vpop.f32.mrb[0].mxu0
    %v1424 = vadd.f32 0.0, %v1423
    %v1425 = vpop.f32.mrb[0].mxu0
    %v1426 = vadd.f32 0.0, %v1425
    %1427 = vmatprep.mubr.f32.mxu0 0.0
    %1428 = vmatmul.mubr.f32.gmra.mrb[0].mxu0 %v57
    %v1429 = vpop.f32.mrb[0].mxu0
    %v1430 = vadd.f32 0.0, %v1429
    %v1431 = vpop.f32.mrb[0].mxu0
    %v1432 = vadd.f32 0.0, %v1431
    %1433 = vmatprep.mubr.f32.mxu0 0.0
    %1434 = vmatmul.mubr.f32.gmra.mrb[0].mxu0 %v58
    %v1435 = vpop.f32.mrb[0].mxu0
    %v1436 = vadd.f32 0.0, %v1435
    %v1437 = vpop.f32.mrb[0].mxu0
    %v1438 = vadd.f32 0.0, %v1437
    %1439 = vmatprep.mubr.f32.mxu0 0.0
    %1440 = vmatmul.mubr.f32.gmra.mrb[0].mxu0 %v59
    %v1441 = vpop.f32.mrb[0].mxu0
    %v1442 = vadd.f32 0.0, %v1441
    %v1443 = vpop.f32.mrb[0].mxu0
    %v1444 = vadd.f32 0.0, %v1443
    %1445 = vmatprep.mubr.f32.mxu0 0.0
    %1446 = vmatmul.mubr.f32.gmra.mrb[0].mxu0 %v60
    %v1447 = vpop.f32.mrb[0].mxu0
    %v1448 = vadd.f32 0.0, %v1447
    %v1449 = vpop.f32.mrb[0].mxu0
    %v1450 = vadd.f32 0.0, %v1449
    %1451 = vmatprep.mubr.f32.mxu0 0.0
    %1452 = vmatmul.mubr.f32.gmra.mrb[0].mxu0 %v61
    %v1453 = vpop.f32.mrb[0].mxu0
    %v1454 = vadd.f32 0.0, %v1453
    %v1455 = vpop.f32.mrb[0].mxu0
    %v1456 = vadd.f32 0.0, %v1455
    %1457 = vmatprep.mubr.f32.mxu0 0.0
    %1458 = vmatmul.mubr.f32.gmra.mrb[0].mxu0 %v62
    %v1459 = vpop.f32.mrb[0].mxu0
    %v1460 = vadd.f32 0.0, %v1459
    %v1461 = vpop.f32.mrb[0].mxu0
    %v1462 = vadd.f32 0.0, %v1461
    %1463 = vmatprep.mubr.f32.mxu0 0.0
    %1464 = vmatmul.mubr.f32.gmra.mrb[0].mxu0 %v63
    %v1465 = vpop.f32.mrb[0].mxu0
    %v1466 = vadd.f32 0.0, %v1465
    %v1467 = vpop.f32.mrb[0].mxu0
    %v1468 = vadd.f32 0.0, %v1467
    %1469 = vmatprep.mubr.f32.mxu0 0.0
    %1470 = vmatmul.mubr.f32.gmra.mrb[0].mxu0 %v64
    %v1471 = vpop.f32.mrb[0].mxu0
    %v1472 = vadd.f32 0.0, %v1471
    %v1473 = vpop.f32.mrb[0].mxu0
    %v1474 = vadd.f32 0.0, %v1473
    %1475 = vmatprep.mubr.f32.mxu0 0.0
    %1476 = vmatmul.mubr.f32.gmra.mrb[0].mxu0 %v65
    %v1477 = vpop.f32.mrb[0].mxu0
    %v1478 = vadd.f32 0.0, %v1477
    %v1479 = vpop.f32.mrb[0].mxu0
    %v1480 = vadd.f32 0.0, %v1479
    %1481 = vmatprep.mubr.f32.mxu0 0.0
    %1482 = vmatmul.mubr.f32.gmra.mrb[0].mxu0 %v66
    %v1483 = vpop.f32.mrb[0].mxu0
    %v1484 = vadd.f32 0.0, %v1483
    %v1485 = vpop.f32.mrb[0].mxu0
    %v1486 = vadd.f32 0.0, %v1485
    %1487 = vmatprep.mubr.f32.mxu0 0.0
    %1488 = vmatmul.mubr.f32.gmra.mrb[0].mxu0 %v67
    %v1489 = vpop.f32.mrb[0].mxu0
    %v1490 = vadd.f32 0.0, %v1489
    %v1491 = vpop.f32.mrb[0].mxu0
    %v1492 = vadd.f32 0.0, %v1491
    %1493 = vmatprep.mubr.f32.mxu0 0.0
    %1494 = vmatmul.mubr.f32.gmra.mrb[0].mxu0 %v68
    %v1495 = vpop.f32.mrb[0].mxu0
    %v1496 = vadd.f32 0.0, %v1495
    %v1497 = vpop.f32.mrb[0].mxu0
    %v1498 = vadd.f32 0.0, %v1497
    %1499 = vdwg.mxu0
    %1500 = vmatprep.subr.mxu0 %v84
    %1501 = vmatpush1.msra.mxu0 %v83
    %1502 = vmatprep.subr.mxu0 %v103
    %1503 = vmatpush1.msra.mxu0 %v102
    %1504 = vmatprep.subr.mxu0 %v122
    %1505 = vmatpush1.msra.mxu0 %v121
    %1506 = vmatprep.subr.mxu0 %v141
    %1507 = vmatpush1.msra.mxu0 %v140
    %1508 = vmatprep.subr.mxu0 %v160
    %1509 = vmatpush1.msra.mxu0 %v159
    %1510 = vmatprep.subr.mxu0 %v179
    %1511 = vmatpush1.msra.mxu0 %v178
    %1512 = vmatprep.subr.mxu0 %v198
    %1513 = vmatpush1.msra.mxu0 %v197
    %1514 = vmatprep.subr.mxu0 %v217
    %1515 = vmatpush1.msra.mxu0 %v216
    %1516 = vmatprep.subr.mxu0 %v236
    %1517 = vmatpush1.msra.mxu0 %v235
    %1518 = vmatprep.subr.mxu0 %v255
    %1519 = vmatpush1.msra.mxu0 %v254
    %1520 = vmatprep.subr.mxu0 %v274
    %1521 = vmatpush1.msra.mxu0 %v273
    %1522 = vmatprep.subr.mxu0 %v293
    %1523 = vmatpush1.msra.mxu0 %v292
    %1524 = vmatprep.subr.mxu0 %v312
    %1525 = vmatpush1.msra.mxu0 %v311
    %1526 = vmatprep.subr.mxu0 %v331
    %1527 = vmatpush1.msra.mxu0 %v330
    %1528 = vmatprep.subr.mxu0 %v350
    %1529 = vmatpush1.msra.mxu0 %v349
    %1530 = vmatprep.subr.mxu0 %v369
    %1531 = vmatpush1.msra.mxu0 %v368
    %1532 = vmatprep.subr.mxu0 0.0
    %1533 = vmatpush1.msra.mxu0 0.0
    %1534 = vmatprep.subr.mxu0 0.0
    %1535 = vmatpush1.msra.mxu0 0.0
    %1536 = vmatprep.subr.mxu0 0.0
    %1537 = vmatpush1.msra.mxu0 0.0
    %1538 = vmatprep.subr.mxu0 0.0
    %1539 = vmatpush1.msra.mxu0 0.0
    %1540 = vmatprep.subr.mxu0 0.0
    %1541 = vmatpush1.msra.mxu0 0.0
    %1542 = vmatprep.subr.mxu0 0.0
    %1543 = vmatpush1.msra.mxu0 0.0
    %1544 = vmatprep.subr.mxu0 0.0
    %1545 = vmatpush1.msra.mxu0 0.0
    %1546 = vmatprep.subr.mxu0 0.0
    %1547 = vmatpush1.msra.mxu0 0.0
    %1548 = vmatprep.subr.mxu0 0.0
    %1549 = vmatpush1.msra.mxu0 0.0
    %1550 = vmatprep.subr.mxu0 0.0
    %1551 = vmatpush1.msra.mxu0 0.0
    %1552 = vmatprep.subr.mxu0 0.0
    %1553 = vmatpush1.msra.mxu0 0.0
    %1554 = vmatprep.subr.mxu0 0.0
    %1555 = vmatpush1.msra.mxu0 0.0
    %1556 = vmatprep.subr.mxu0 0.0
    %1557 = vmatpush1.msra.mxu0 0.0
    %1558 = vmatprep.subr.mxu0 0.0
    %1559 = vmatpush1.msra.mxu0 0.0
    %1560 = vmatprep.subr.mxu0 0.0
    %1561 = vmatpush1.msra.mxu0 0.0
    %1562 = vmatprep.subr.mxu0 0.0
    %1563 = vmatpush1.msra.mxu0 0.0
    %1564 = vmatprep.mubr.f32.mxu0 0.0
    %1565 = vmatmul.mubr.f32.gmra.mrb[0].mxu0 %v53
    %v1566 = vpop.f32.mrb[0].mxu0
    %v1567 = vadd.f32 0.0, %v1566
    %v1568 = vpop.f32.mrb[0].mxu0
    %v1569 = vadd.f32 0.0, %v1568
    %1570 = vmatprep.mubr.f32.mxu0 0.0
    %1571 = vmatmul.mubr.f32.gmra.mrb[0].mxu0 %v54
    %v1572 = vpop.f32.mrb[0].mxu0
    %v1573 = vadd.f32 0.0, %v1572
    %v1574 = vpop.f32.mrb[0].mxu0
    %v1575 = vadd.f32 0.0, %v1574
    %1576 = vmatprep.mubr.f32.mxu0 0.0
    %1577 = vmatmul.mubr.f32.gmra.mrb[0].mxu0 %v55
    %v1578 = vpop.f32.mrb[0].mxu0
    %v1579 = vadd.f32 0.0, %v1578
    %v1580 = vpop.f32.mrb[0].mxu0
    %v1581 = vadd.f32 0.0, %v1580
    %1582 = vmatprep.mubr.f32.mxu0 0.0
    %1583 = vmatmul.mubr.f32.gmra.mrb[0].mxu0 %v56
    %v1584 = vpop.f32.mrb[0].mxu0
    %v1585 = vadd.f32 0.0, %v1584
    %v1586 = vpop.f32.mrb[0].mxu0
    %v1587 = vadd.f32 0.0, %v1586
    %1588 = vmatprep.mubr.f32.mxu0 0.0
    %1589 = vmatmul.mubr.f32.gmra.mrb[0].mxu0 %v57
    %v1590 = vpop.f32.mrb[0].mxu0
    %v1591 = vadd.f32 0.0, %v1590
    %v1592 = vpop.f32.mrb[0].mxu0
    %v1593 = vadd.f32 0.0, %v1592
    %1594 = vmatprep.mubr.f32.mxu0 0.0
    %1595 = vmatmul.mubr.f32.gmra.mrb[0].mxu0 %v58
    %v1596 = vpop.f32.mrb[0].mxu0
    %v1597 = vadd.f32 0.0, %v1596
    %v1598 = vpop.f32.mrb[0].mxu0
    %v1599 = vadd.f32 0.0, %v1598
    %1600 = vmatprep.mubr.f32.mxu0 0.0
    %1601 = vmatmul.mubr.f32.gmra.mrb[0].mxu0 %v59
    %v1602 = vpop.f32.mrb[0].mxu0
    %v1603 = vadd.f32 0.0, %v1602
    %v1604 = vpop.f32.mrb[0].mxu0
    %v1605 = vadd.f32 0.0, %v1604
    %1606 = vmatprep.mubr.f32.mxu0 0.0
    %1607 = vmatmul.mubr.f32.gmra.mrb[0].mxu0 %v60
    %v1608 = vpop.f32.mrb[0].mxu0
    %v1609 = vadd.f32 0.0, %v1608
    %v1610 = vpop.f32.mrb[0].mxu0
    %v1611 = vadd.f32 0.0, %v1610
    %1612 = vmatprep.mubr.f32.mxu0 0.0
    %1613 = vmatmul.mubr.f32.gmra.mrb[0].mxu0 %v61
    %v1614 = vpop.f32.mrb[0].mxu0
    %v1615 = vadd.f32 0.0, %v1614
    %v1616 = vpop.f32.mrb[0].mxu0
    %v1617 = vadd.f32 0.0, %v1616
    %1618 = vmatprep.mubr.f32.mxu0 0.0
    %1619 = vmatmul.mubr.f32.gmra.mrb[0].mxu0 %v62
    %v1620 = vpop.f32.mrb[0].mxu0
    %v1621 = vadd.f32 0.0, %v1620
    %v1622 = vpop.f32.mrb[0].mxu0
    %v1623 = vadd.f32 0.0, %v1622
    %1624 = vmatprep.mubr.f32.mxu0 0.0
    %1625 = vmatmul.mubr.f32.gmra.mrb[0].mxu0 %v63
    %v1626 = vpop.f32.mrb[0].mxu0
    %v1627 = vadd.f32 0.0, %v1626
    %v1628 = vpop.f32.mrb[0].mxu0
    %v1629 = vadd.f32 0.0, %v1628
    %1630 = vmatprep.mubr.f32.mxu0 0.0
    %1631 = vmatmul.mubr.f32.gmra.mrb[0].mxu0 %v64
    %v1632 = vpop.f32.mrb[0].mxu0
    %v1633 = vadd.f32 0.0, %v1632
    %v1634 = vpop.f32.mrb[0].mxu0
    %v1635 = vadd.f32 0.0, %v1634
    %1636 = vmatprep.mubr.f32.mxu0 0.0
    %1637 = vmatmul.mubr.f32.gmra.mrb[0].mxu0 %v65
    %v1638 = vpop.f32.mrb[0].mxu0
    %v1639 = vadd.f32 0.0, %v1638
    %v1640 = vpop.f32.mrb[0].mxu0
    %v1641 = vadd.f32 0.0, %v1640
    %1642 = vmatprep.mubr.f32.mxu0 0.0
    %1643 = vmatmul.mubr.f32.gmra.mrb[0].mxu0 %v66
    %v1644 = vpop.f32.mrb[0].mxu0
    %v1645 = vadd.f32 0.0, %v1644
    %v1646 = vpop.f32.mrb[0].mxu0
    %v1647 = vadd.f32 0.0, %v1646
    %1648 = vmatprep.mubr.f32.mxu0 0.0
    %1649 = vmatmul.mubr.f32.gmra.mrb[0].mxu0 %v67
    %v1650 = vpop.f32.mrb[0].mxu0
    %v1651 = vadd.f32 0.0, %v1650
    %v1652 = vpop.f32.mrb[0].mxu0
    %v1653 = vadd.f32 0.0, %v1652
    %1654 = vmatprep.mubr.f32.mxu0 0.0
    %1655 = vmatmul.mubr.f32.gmra.mrb[0].mxu0 %v68
    %v1656 = vpop.f32.mrb[0].mxu0
    %v1657 = vadd.f32 0.0, %v1656
    %v1658 = vpop.f32.mrb[0].mxu0
    %v1659 = vadd.f32 0.0, %v1658
    %1660 = vdwg.mxu0
    %1661 = vmatprep.subr.mxu0 %v86
    %1662 = vmatpush1.msra.mxu0 %v85
    %1663 = vmatprep.subr.mxu0 %v105
    %1664 = vmatpush1.msra.mxu0 %v104
    %1665 = vmatprep.subr.mxu0 %v124
    %1666 = vmatpush1.msra.mxu0 %v123
    %1667 = vmatprep.subr.mxu0 %v143
    %1668 = vmatpush1.msra.mxu0 %v142
    %1669 = vmatprep.subr.mxu0 %v162
    %1670 = vmatpush1.msra.mxu0 %v161
    %1671 = vmatprep.subr.mxu0 %v181
    %1672 = vmatpush1.msra.mxu0 %v180
    %1673 = vmatprep.subr.mxu0 %v200
    %1674 = vmatpush1.msra.mxu0 %v199
    %1675 = vmatprep.subr.mxu0 %v219
    %1676 = vmatpush1.msra.mxu0 %v218
    %1677 = vmatprep.subr.mxu0 %v238
    %1678 = vmatpush1.msra.mxu0 %v237
    %1679 = vmatprep.subr.mxu0 %v257
    %1680 = vmatpush1.msra.mxu0 %v256
    %1681 = vmatprep.subr.mxu0 %v276
    %1682 = vmatpush1.msra.mxu0 %v275
    %1683 = vmatprep.subr.mxu0 %v295
    %1684 = vmatpush1.msra.mxu0 %v294
    %1685 = vmatprep.subr.mxu0 %v314
    %1686 = vmatpush1.msra.mxu0 %v313
    %1687 = vmatprep.subr.mxu0 %v333
    %1688 = vmatpush1.msra.mxu0 %v332
    %1689 = vmatprep.subr.mxu0 %v352
    %1690 = vmatpush1.msra.mxu0 %v351
    %1691 = vmatprep.subr.mxu0 %v371
    %1692 = vmatpush1.msra.mxu0 %v370
    %1693 = vmatprep.subr.mxu0 0.0
    %1694 = vmatpush1.msra.mxu0 0.0
    %1695 = vmatprep.subr.mxu0 0.0
    %1696 = vmatpush1.msra.mxu0 0.0
    %1697 = vmatprep.subr.mxu0 0.0
    %1698 = vmatpush1.msra.mxu0 0.0
    %1699 = vmatprep.subr.mxu0 0.0
    %1700 = vmatpush1.msra.mxu0 0.0
    %1701 = vmatprep.subr.mxu0 0.0
    %1702 = vmatpush1.msra.mxu0 0.0
    %1703 = vmatprep.subr.mxu0 0.0
    %1704 = vmatpush1.msra.mxu0 0.0
    %1705 = vmatprep.subr.mxu0 0.0
    %1706 = vmatpush1.msra.mxu0 0.0
    %1707 = vmatprep.subr.mxu0 0.0
    %1708 = vmatpush1.msra.mxu0 0.0
    %1709 = vmatprep.subr.mxu0 0.0
    %1710 = vmatpush1.msra.mxu0 0.0
    %1711 = vmatprep.subr.mxu0 0.0
    %1712 = vmatpush1.msra.mxu0 0.0
    %1713 = vmatprep.subr.mxu0 0.0
    %1714 = vmatpush1.msra.mxu0 0.0
    %1715 = vmatprep.subr.mxu0 0.0
    %1716 = vmatpush1.msra.mxu0 0.0
    %1717 = vmatprep.subr.mxu0 0.0
    %1718 = vmatpush1.msra.mxu0 0.0
    %1719 = vmatprep.subr.mxu0 0.0
    %1720 = vmatpush1.msra.mxu0 0.0
    %1721 = vmatprep.subr.mxu0 0.0
    %1722 = vmatpush1.msra.mxu0 0.0
    %1723 = vmatprep.subr.mxu0 0.0
    %1724 = vmatpush1.msra.mxu0 0.0
    %1725 = vmatprep.mubr.f32.mxu0 0.0
    %1726 = vmatmul.mubr.f32.gmra.mrb[0].mxu0 %v53
    %v1727 = vpop.f32.mrb[0].mxu0
    %v1728 = vadd.f32 0.0, %v1727
    %v1729 = vpop.f32.mrb[0].mxu0
    %v1730 = vadd.f32 0.0, %v1729
    %1731 = vmatprep.mubr.f32.mxu0 0.0
    %1732 = vmatmul.mubr.f32.gmra.mrb[0].mxu0 %v54
    %v1733 = vpop.f32.mrb[0].mxu0
    %v1734 = vadd.f32 0.0, %v1733
    %v1735 = vpop.f32.mrb[0].mxu0
    %v1736 = vadd.f32 0.0, %v1735
    %1737 = vmatprep.mubr.f32.mxu0 0.0
    %1738 = vmatmul.mubr.f32.gmra.mrb[0].mxu0 %v55
    %v1739 = vpop.f32.mrb[0].mxu0
    %v1740 = vadd.f32 0.0, %v1739
    %v1741 = vpop.f32.mrb[0].mxu0
    %v1742 = vadd.f32 0.0, %v1741
    %1743 = vmatprep.mubr.f32.mxu0 0.0
    %1744 = vmatmul.mubr.f32.gmra.mrb[0].mxu0 %v56
    %v1745 = vpop.f32.mrb[0].mxu0
    %v1746 = vadd.f32 0.0, %v1745
    %v1747 = vpop.f32.mrb[0].mxu0
    %v1748 = vadd.f32 0.0, %v1747
    %1749 = vmatprep.mubr.f32.mxu0 0.0
    %1750 = vmatmul.mubr.f32.gmra.mrb[0].mxu0 %v57
    %v1751 = vpop.f32.mrb[0].mxu0
    %v1752 = vadd.f32 0.0, %v1751
    %v1753 = vpop.f32.mrb[0].mxu0
    %v1754 = vadd.f32 0.0, %v1753
    %1755 = vmatprep.mubr.f32.mxu0 0.0
    %1756 = vmatmul.mubr.f32.gmra.mrb[0].mxu0 %v58
    %v1757 = vpop.f32.mrb[0].mxu0
    %v1758 = vadd.f32 0.0, %v1757
    %v1759 = vpop.f32.mrb[0].mxu0
    %v1760 = vadd.f32 0.0, %v1759
    %1761 = vmatprep.mubr.f32.mxu0 0.0
    %1762 = vmatmul.mubr.f32.gmra.mrb[0].mxu0 %v59
    %v1763 = vpop.f32.mrb[0].mxu0
    %v1764 = vadd.f32 0.0, %v1763
    %v1765 = vpop.f32.mrb[0].mxu0
    %v1766 = vadd.f32 0.0, %v1765
    %1767 = vmatprep.mubr.f32.mxu0 0.0
    %1768 = vmatmul.mubr.f32.gmra.mrb[0].mxu0 %v60
    %v1769 = vpop.f32.mrb[0].mxu0
    %v1770 = vadd.f32 0.0, %v1769
    %v1771 = vpop.f32.mrb[0].mxu0
    %v1772 = vadd.f32 0.0, %v1771
    %1773 = vmatprep.mubr.f32.mxu0 0.0
    %1774 = vmatmul.mubr.f32.gmra.mrb[0].mxu0 %v61
    %v1775 = vpop.f32.mrb[0].mxu0
    %v1776 = vadd.f32 0.0, %v1775
    %v1777 = vpop.f32.mrb[0].mxu0
    %v1778 = vadd.f32 0.0, %v1777
    %1779 = vmatprep.mubr.f32.mxu0 0.0
    %1780 = vmatmul.mubr.f32.gmra.mrb[0].mxu0 %v62
    %v1781 = vpop.f32.mrb[0].mxu0
    %v1782 = vadd.f32 0.0, %v1781
    %v1783 = vpop.f32.mrb[0].mxu0
    %v1784 = vadd.f32 0.0, %v1783
    %1785 = vmatprep.mubr.f32.mxu0 0.0
    %1786 = vmatmul.mubr.f32.gmra.mrb[0].mxu0 %v63
    %v1787 = vpop.f32.mrb[0].mxu0
    %v1788 = vadd.f32 0.0, %v1787
    %v1789 = vpop.f32.mrb[0].mxu0
    %v1790 = vadd.f32 0.0, %v1789
    %1791 = vmatprep.mubr.f32.mxu0 0.0
    %1792 = vmatmul.mubr.f32.gmra.mrb[0].mxu0 %v64
    %v1793 = vpop.f32.mrb[0].mxu0
    %v1794 = vadd.f32 0.0, %v1793
    %v1795 = vpop.f32.mrb[0].mxu0
    %v1796 = vadd.f32 0.0, %v1795
    %1797 = vmatprep.mubr.f32.mxu0 0.0
    %1798 = vmatmul.mubr.f32.gmra.mrb[0].mxu0 %v65
    %v1799 = vpop.f32.mrb[0].mxu0
    %v1800 = vadd.f32 0.0, %v1799
    %v1801 = vpop.f32.mrb[0].mxu0
    %v1802 = vadd.f32 0.0, %v1801
    %1803 = vmatprep.mubr.f32.mxu0 0.0
    %1804 = vmatmul.mubr.f32.gmra.mrb[0].mxu0 %v66
    %v1805 = vpop.f32.mrb[0].mxu0
    %v1806 = vadd.f32 0.0, %v1805
    %v1807 = vpop.f32.mrb[0].mxu0
    %v1808 = vadd.f32 0.0, %v1807
    %1809 = vmatprep.mubr.f32.mxu0 0.0
    %1810 = vmatmul.mubr.f32.gmra.mrb[0].mxu0 %v67
    %v1811 = vpop.f32.mrb[0].mxu0
    %v1812 = vadd.f32 0.0, %v1811
    %v1813 = vpop.f32.mrb[0].mxu0
    %v1814 = vadd.f32 0.0, %v1813
    %1815 = vmatprep.mubr.f32.mxu0 0.0
    %1816 = vmatmul.mubr.f32.gmra.mrb[0].mxu0 %v68
    %v1817 = vpop.f32.mrb[0].mxu0
    %v1818 = vadd.f32 0.0, %v1817
    %v1819 = vpop.f32.mrb[0].mxu0
    %v1820 = vadd.f32 0.0, %v1819
    %1821 = vdwg.mxu0
    %1822 = vmatprep.subr.mxu0 0.0
    %1823 = vmatpush1.msra.mxu0 %v87
    %1824 = vmatprep.subr.mxu0 0.0
    %1825 = vmatpush1.msra.mxu0 %v106
    %1826 = vmatprep.subr.mxu0 0.0
    %1827 = vmatpush1.msra.mxu0 %v125
    %1828 = vmatprep.subr.mxu0 0.0
    %1829 = vmatpush1.msra.mxu0 %v144
    %1830 = vmatprep.subr.mxu0 0.0
    %1831 = vmatpush1.msra.mxu0 %v163
    %1832 = vmatprep.subr.mxu0 0.0
    %1833 = vmatpush1.msra.mxu0 %v182
    %1834 = vmatprep.subr.mxu0 0.0
    %1835 = vmatpush1.msra.mxu0 %v201
    %1836 = vmatprep.subr.mxu0 0.0
    %1837 = vmatpush1.msra.mxu0 %v220
    %1838 = vmatprep.subr.mxu0 0.0
    %1839 = vmatpush1.msra.mxu0 %v239
    %1840 = vmatprep.subr.mxu0 0.0
    %1841 = vmatpush1.msra.mxu0 %v258
    %1842 = vmatprep.subr.mxu0 0.0
    %1843 = vmatpush1.msra.mxu0 %v277
    %1844 = vmatprep.subr.mxu0 0.0
    %1845 = vmatpush1.msra.mxu0 %v296
    %1846 = vmatprep.subr.mxu0 0.0
    %1847 = vmatpush1.msra.mxu0 %v315
    %1848 = vmatprep.subr.mxu0 0.0
    %1849 = vmatpush1.msra.mxu0 %v334
    %1850 = vmatprep.subr.mxu0 0.0
    %1851 = vmatpush1.msra.mxu0 %v353
    %1852 = vmatprep.subr.mxu0 0.0
    %1853 = vmatpush1.msra.mxu0 %v372
    %1854 = vmatprep.subr.mxu0 0.0
    %1855 = vmatpush1.msra.mxu0 0.0
    %1856 = vmatprep.subr.mxu0 0.0
    %1857 = vmatpush1.msra.mxu0 0.0
    %1858 = vmatprep.subr.mxu0 0.0
    %1859 = vmatpush1.msra.mxu0 0.0
    %1860 = vmatprep.subr.mxu0 0.0
    %1861 = vmatpush1.msra.mxu0 0.0
    %1862 = vmatprep.subr.mxu0 0.0
    %1863 = vmatpush1.msra.mxu0 0.0
    %1864 = vmatprep.subr.mxu0 0.0
    %1865 = vmatpush1.msra.mxu0 0.0
    %1866 = vmatprep.subr.mxu0 0.0
    %1867 = vmatpush1.msra.mxu0 0.0
    %1868 = vmatprep.subr.mxu0 0.0
    %1869 = vmatpush1.msra.mxu0 0.0
    %1870 = vmatprep.subr.mxu0 0.0
    %1871 = vmatpush1.msra.mxu0 0.0
    %1872 = vmatprep.subr.mxu0 0.0
    %1873 = vmatpush1.msra.mxu0 0.0
    %1874 = vmatprep.subr.mxu0 0.0
    %1875 = vmatpush1.msra.mxu0 0.0
    %1876 = vmatprep.subr.mxu0 0.0
    %1877 = vmatpush1.msra.mxu0 0.0
    %1878 = vmatprep.subr.mxu0 0.0
    %1879 = vmatpush1.msra.mxu0 0.0
    %1880 = vmatprep.subr.mxu0 0.0
    %1881 = vmatpush1.msra.mxu0 0.0
    %1882 = vmatprep.subr.mxu0 0.0
    %1883 = vmatpush1.msra.mxu0 0.0
    %1884 = vmatprep.subr.mxu0 0.0
    %1885 = vmatpush1.msra.mxu0 0.0
    %1886 = vmatprep.mubr.f32.mxu0 0.0
    %1887 = vmatmul.mubr.f32.gmra.mrb[0].mxu0 %v53
    %v1888 = vpop.f32.mrb[0].mxu0
    %v1889 = vadd.f32 0.0, %v1888
    %v1890 = vpop.f32.mrb[0].mxu0
    %1891 = vmatprep.mubr.f32.mxu0 0.0
    %1892 = vmatmul.mubr.f32.gmra.mrb[0].mxu0 %v54
    %v1893 = vpop.f32.mrb[0].mxu0
    %v1894 = vadd.f32 0.0, %v1893
    %v1895 = vpop.f32.mrb[0].mxu0
    %1896 = vmatprep.mubr.f32.mxu0 0.0
    %1897 = vmatmul.mubr.f32.gmra.mrb[0].mxu0 %v55
    %v1898 = vpop.f32.mrb[0].mxu0
    %v1899 = vadd.f32 0.0, %v1898
    %v1900 = vpop.f32.mrb[0].mxu0
    %1901 = vmatprep.mubr.f32.mxu0 0.0
    %1902 = vmatmul.mubr.f32.gmra.mrb[0].mxu0 %v56
    %v1903 = vpop.f32.mrb[0].mxu0
    %v1904 = vadd.f32 0.0, %v1903
    %v1905 = vpop.f32.mrb[0].mxu0
    %1906 = vmatprep.mubr.f32.mxu0 0.0
    %1907 = vmatmul.mubr.f32.gmra.mrb[0].mxu0 %v57
    %v1908 = vpop.f32.mrb[0].mxu0
    %v1909 = vadd.f32 0.0, %v1908
    %v1910 = vpop.f32.mrb[0].mxu0
    %1911 = vmatprep.mubr.f32.mxu0 0.0
    %1912 = vmatmul.mubr.f32.gmra.mrb[0].mxu0 %v58
    %v1913 = vpop.f32.mrb[0].mxu0
    %v1914 = vadd.f32 0.0, %v1913
    %v1915 = vpop.f32.mrb[0].mxu0
    %1916 = vmatprep.mubr.f32.mxu0 0.0
    %1917 = vmatmul.mubr.f32.gmra.mrb[0].mxu0 %v59
    %v1918 = vpop.f32.mrb[0].mxu0
    %v1919 = vadd.f32 0.0, %v1918
    %v1920 = vpop.f32.mrb[0].mxu0
    %1921 = vmatprep.mubr.f32.mxu0 0.0
    %1922 = vmatmul.mubr.f32.gmra.mrb[0].mxu0 %v60
    %v1923 = vpop.f32.mrb[0].mxu0
    %v1924 = vadd.f32 0.0, %v1923
    %v1925 = vpop.f32.mrb[0].mxu0
    %1926 = vmatprep.mubr.f32.mxu0 0.0
    %1927 = vmatmul.mubr.f32.gmra.mrb[0].mxu0 %v61
    %v1928 = vpop.f32.mrb[0].mxu0
    %v1929 = vadd.f32 0.0, %v1928
    %v1930 = vpop.f32.mrb[0].mxu0
    %1931 = vmatprep.mubr.f32.mxu0 0.0
    %1932 = vmatmul.mubr.f32.gmra.mrb[0].mxu0 %v62
    %v1933 = vpop.f32.mrb[0].mxu0
    %v1934 = vadd.f32 0.0, %v1933
    %v1935 = vpop.f32.mrb[0].mxu0
    %1936 = vmatprep.mubr.f32.mxu0 0.0
    %1937 = vmatmul.mubr.f32.gmra.mrb[0].mxu0 %v63
    %v1938 = vpop.f32.mrb[0].mxu0
    %v1939 = vadd.f32 0.0, %v1938
    %v1940 = vpop.f32.mrb[0].mxu0
    %1941 = vmatprep.mubr.f32.mxu0 0.0
    %1942 = vmatmul.mubr.f32.gmra.mrb[0].mxu0 %v64
    %v1943 = vpop.f32.mrb[0].mxu0
    %v1944 = vadd.f32 0.0, %v1943
    %v1945 = vpop.f32.mrb[0].mxu0
    %1946 = vmatprep.mubr.f32.mxu0 0.0
    %1947 = vmatmul.mubr.f32.gmra.mrb[0].mxu0 %v65
    %v1948 = vpop.f32.mrb[0].mxu0
    %v1949 = vadd.f32 0.0, %v1948
    %v1950 = vpop.f32.mrb[0].mxu0
    %1951 = vmatprep.mubr.f32.mxu0 0.0
    %1952 = vmatmul.mubr.f32.gmra.mrb[0].mxu0 %v66
    %v1953 = vpop.f32.mrb[0].mxu0
    %v1954 = vadd.f32 0.0, %v1953
    %v1955 = vpop.f32.mrb[0].mxu0
    %1956 = vmatprep.mubr.f32.mxu0 0.0
    %1957 = vmatmul.mubr.f32.gmra.mrb[0].mxu0 %v67
    %v1958 = vpop.f32.mrb[0].mxu0
    %v1959 = vadd.f32 0.0, %v1958
    %v1960 = vpop.f32.mrb[0].mxu0
    %1961 = vmatprep.mubr.f32.mxu0 0.0
    %1962 = vmatmul.mubr.f32.gmra.mrb[0].mxu0 %v68
    %v1963 = vpop.f32.mrb[0].mxu0
    %v1964 = vadd.f32 0.0, %v1963
    %v1965 = vpop.f32.mrb[0].mxu0
    %1966 = vdwg.mxu0
    %v1967 = vand.u32 2147483647, %v1084
    %v1968 = vand.u32 2147483647, %v1090
    %v1969 = vand.u32 2147483647, %v1096
    %v1970 = vand.u32 2147483647, %v1102
    %v1971 = vand.u32 2147483647, %v1108
    %v1972 = vand.u32 2147483647, %v1114
    %v1973 = vand.u32 2147483647, %v1120
    %v1974 = vand.u32 2147483647, %v1126
    %v1975 = vand.u32 2147483647, %v1132
    %v1976 = vand.u32 2147483647, %v1138
    %v1977 = vand.u32 2147483647, %v1144
    %v1978 = vand.u32 2147483647, %v1150
    %v1979 = vand.u32 2147483647, %v1156
    %v1980 = vand.u32 2147483647, %v1162
    %v1981 = vand.u32 2147483647, %v1168
    %v1982 = vand.u32 2147483647, %v1174
    %v1983 = vmul.f32 %v440, %v1967
    %v1984 = vmul.f32 %v446, %v1968
    %v1985 = vmul.f32 %v452, %v1969
    %v1986 = vmul.f32 %v458, %v1970
    %v1987 = vmul.f32 %v464, %v1971
    %v1988 = vmul.f32 %v470, %v1972
    %v1989 = vmul.f32 %v476, %v1973
    %v1990 = vmul.f32 %v482, %v1974
    %v1991 = vmul.f32 %v488, %v1975
    %v1992 = vmul.f32 %v494, %v1976
    %v1993 = vmul.f32 %v500, %v1977
    %v1994 = vmul.f32 %v506, %v1978
    %v1995 = vmul.f32 %v512, %v1979
    %v1996 = vmul.f32 %v518, %v1980
    %v1997 = vmul.f32 %v524, %v1981
    %v1998 = vmul.f32 %v530, %v1982
    %v1999 = vadd.f32 %v1728, %v1983
    %v2000 = vadd.f32 %v1734, %v1984
    %v2001 = vadd.f32 %v1740, %v1985
    %v2002 = vadd.f32 %v1746, %v1986
    %v2003 = vadd.f32 %v1752, %v1987
    %v2004 = vadd.f32 %v1758, %v1988
    %v2005 = vadd.f32 %v1764, %v1989
    %v2006 = vadd.f32 %v1770, %v1990
    %v2007 = vadd.f32 %v1776, %v1991
    %v2008 = vadd.f32 %v1782, %v1992
    %v2009 = vadd.f32 %v1788, %v1993
    %v2010 = vadd.f32 %v1794, %v1994
    %v2011 = vadd.f32 %v1800, %v1995
    %v2012 = vadd.f32 %v1806, %v1996
    %v2013 = vadd.f32 %v1812, %v1997
    %v2014 = vadd.f32 %v1818, %v1998
    %v2015 = vand.u32 2147483647, %v1086
    %v2016 = vand.u32 2147483647, %v1092
    %v2017 = vand.u32 2147483647, %v1098
    %v2018 = vand.u32 2147483647, %v1104
    %v2019 = vand.u32 2147483647, %v1110
    %v2020 = vand.u32 2147483647, %v1116
    %v2021 = vand.u32 2147483647, %v1122
    %v2022 = vand.u32 2147483647, %v1128
    %v2023 = vand.u32 2147483647, %v1134
    %v2024 = vand.u32 2147483647, %v1140
    %v2025 = vand.u32 2147483647, %v1146
    %v2026 = vand.u32 2147483647, %v1152
    %v2027 = vand.u32 2147483647, %v1158
    %v2028 = vand.u32 2147483647, %v1164
    %v2029 = vand.u32 2147483647, %v1170
    %v2030 = vand.u32 2147483647, %v1176
    %v2031 = vmul.f32 %v442, %v2015
    %v2032 = vmul.f32 %v448, %v2016
    %v2033 = vmul.f32 %v454, %v2017
    %v2034 = vmul.f32 %v460, %v2018
    %v2035 = vmul.f32 %v466, %v2019
    %v2036 = vmul.f32 %v472, %v2020
    %v2037 = vmul.f32 %v478, %v2021
    %v2038 = vmul.f32 %v484, %v2022
    %v2039 = vmul.f32 %v490, %v2023
    %v2040 = vmul.f32 %v496, %v2024
    %v2041 = vmul.f32 %v502, %v2025
    %v2042 = vmul.f32 %v508, %v2026
    %v2043 = vmul.f32 %v514, %v2027
    %v2044 = vmul.f32 %v520, %v2028
    %v2045 = vmul.f32 %v526, %v2029
    %v2046 = vmul.f32 %v532, %v2030
    %v2047 = vadd.f32 %v1999, %v2031
    %v2048 = vadd.f32 %v2000, %v2032
    %v2049 = vadd.f32 %v2001, %v2033
    %v2050 = vadd.f32 %v2002, %v2034
    %v2051 = vadd.f32 %v2003, %v2035
    %v2052 = vadd.f32 %v2004, %v2036
    %v2053 = vadd.f32 %v2005, %v2037
    %v2054 = vadd.f32 %v2006, %v2038
    %v2055 = vadd.f32 %v2007, %v2039
    %v2056 = vadd.f32 %v2008, %v2040
    %v2057 = vadd.f32 %v2009, %v2041
    %v2058 = vadd.f32 %v2010, %v2042
    %v2059 = vadd.f32 %v2011, %v2043
    %v2060 = vadd.f32 %v2012, %v2044
    %v2061 = vadd.f32 %v2013, %v2045
    %v2062 = vadd.f32 %v2014, %v2046
    %v2063 = vand.u32 2147483647, %v1245
    %v2064 = vand.u32 2147483647, %v1251
    %v2065 = vand.u32 2147483647, %v1257
    %v2066 = vand.u32 2147483647, %v1263
    %v2067 = vand.u32 2147483647, %v1269
    %v2068 = vand.u32 2147483647, %v1275
    %v2069 = vand.u32 2147483647, %v1281
    %v2070 = vand.u32 2147483647, %v1287
    %v2071 = vand.u32 2147483647, %v1293
    %v2072 = vand.u32 2147483647, %v1299
    %v2073 = vand.u32 2147483647, %v1305
    %v2074 = vand.u32 2147483647, %v1311
    %v2075 = vand.u32 2147483647, %v1317
    %v2076 = vand.u32 2147483647, %v1323
    %v2077 = vand.u32 2147483647, %v1329
    %v2078 = vand.u32 2147483647, %v1335
    %v2079 = vmul.f32 %v601, %v2063
    %v2080 = vmul.f32 %v607, %v2064
    %v2081 = vmul.f32 %v613, %v2065
    %v2082 = vmul.f32 %v619, %v2066
    %v2083 = vmul.f32 %v625, %v2067
    %v2084 = vmul.f32 %v631, %v2068
    %v2085 = vmul.f32 %v637, %v2069
    %v2086 = vmul.f32 %v643, %v2070
    %v2087 = vmul.f32 %v649, %v2071
    %v2088 = vmul.f32 %v655, %v2072
    %v2089 = vmul.f32 %v661, %v2073
    %v2090 = vmul.f32 %v667, %v2074
    %v2091 = vmul.f32 %v673, %v2075
    %v2092 = vmul.f32 %v679, %v2076
    %v2093 = vmul.f32 %v685, %v2077
    %v2094 = vmul.f32 %v691, %v2078
    %v2095 = vadd.f32 %v2047, %v2079
    %v2096 = vadd.f32 %v2048, %v2080
    %v2097 = vadd.f32 %v2049, %v2081
    %v2098 = vadd.f32 %v2050, %v2082
    %v2099 = vadd.f32 %v2051, %v2083
    %v2100 = vadd.f32 %v2052, %v2084
    %v2101 = vadd.f32 %v2053, %v2085
    %v2102 = vadd.f32 %v2054, %v2086
    %v2103 = vadd.f32 %v2055, %v2087
    %v2104 = vadd.f32 %v2056, %v2088
    %v2105 = vadd.f32 %v2057, %v2089
    %v2106 = vadd.f32 %v2058, %v2090
    %v2107 = vadd.f32 %v2059, %v2091
    %v2108 = vadd.f32 %v2060, %v2092
    %v2109 = vadd.f32 %v2061, %v2093
    %v2110 = vadd.f32 %v2062, %v2094
    %v2111 = vand.u32 2147483647, %v1247
    %v2112 = vand.u32 2147483647, %v1253
    %v2113 = vand.u32 2147483647, %v1259
    %v2114 = vand.u32 2147483647, %v1265
    %v2115 = vand.u32 2147483647, %v1271
    %v2116 = vand.u32 2147483647, %v1277
    %v2117 = vand.u32 2147483647, %v1283
    %v2118 = vand.u32 2147483647, %v1289
    %v2119 = vand.u32 2147483647, %v1295
    %v2120 = vand.u32 2147483647, %v1301
    %v2121 = vand.u32 2147483647, %v1307
    %v2122 = vand.u32 2147483647, %v1313
    %v2123 = vand.u32 2147483647, %v1319
    %v2124 = vand.u32 2147483647, %v1325
    %v2125 = vand.u32 2147483647, %v1331
    %v2126 = vand.u32 2147483647, %v1337
    %v2127 = vmul.f32 %v603, %v2111
    %v2128 = vmul.f32 %v609, %v2112
    %v2129 = vmul.f32 %v615, %v2113
    %v2130 = vmul.f32 %v621, %v2114
    %v2131 = vmul.f32 %v627, %v2115
    %v2132 = vmul.f32 %v633, %v2116
    %v2133 = vmul.f32 %v639, %v2117
    %v2134 = vmul.f32 %v645, %v2118
    %v2135 = vmul.f32 %v651, %v2119
    %v2136 = vmul.f32 %v657, %v2120
    %v2137 = vmul.f32 %v663, %v2121
    %v2138 = vmul.f32 %v669, %v2122
    %v2139 = vmul.f32 %v675, %v2123
    %v2140 = vmul.f32 %v681, %v2124
    %v2141 = vmul.f32 %v687, %v2125
    %v2142 = vmul.f32 %v693, %v2126
    %v2143 = vadd.f32 %v2095, %v2127
    %v2144 = vadd.f32 %v2096, %v2128
    %v2145 = vadd.f32 %v2097, %v2129
    %v2146 = vadd.f32 %v2098, %v2130
    %v2147 = vadd.f32 %v2099, %v2131
    %v2148 = vadd.f32 %v2100, %v2132
    %v2149 = vadd.f32 %v2101, %v2133
    %v2150 = vadd.f32 %v2102, %v2134
    %v2151 = vadd.f32 %v2103, %v2135
    %v2152 = vadd.f32 %v2104, %v2136
    %v2153 = vadd.f32 %v2105, %v2137
    %v2154 = vadd.f32 %v2106, %v2138
    %v2155 = vadd.f32 %v2107, %v2139
    %v2156 = vadd.f32 %v2108, %v2140
    %v2157 = vadd.f32 %v2109, %v2141
    %v2158 = vadd.f32 %v2110, %v2142
    %v2159 = vand.u32 2147483647, %v1406
    %v2160 = vand.u32 2147483647, %v1412
    %v2161 = vand.u32 2147483647, %v1418
    %v2162 = vand.u32 2147483647, %v1424
    %v2163 = vand.u32 2147483647, %v1430
    %v2164 = vand.u32 2147483647, %v1436
    %v2165 = vand.u32 2147483647, %v1442
    %v2166 = vand.u32 2147483647, %v1448
    %v2167 = vand.u32 2147483647, %v1454
    %v2168 = vand.u32 2147483647, %v1460
    %v2169 = vand.u32 2147483647, %v1466
    %v2170 = vand.u32 2147483647, %v1472
    %v2171 = vand.u32 2147483647, %v1478
    %v2172 = vand.u32 2147483647, %v1484
    %v2173 = vand.u32 2147483647, %v1490
    %v2174 = vand.u32 2147483647, %v1496
    %v2175 = vmul.f32 %v762, %v2159
    %v2176 = vmul.f32 %v768, %v2160
    %v2177 = vmul.f32 %v774, %v2161
    %v2178 = vmul.f32 %v780, %v2162
    %v2179 = vmul.f32 %v786, %v2163
    %v2180 = vmul.f32 %v792, %v2164
    %v2181 = vmul.f32 %v798, %v2165
    %v2182 = vmul.f32 %v804, %v2166
    %v2183 = vmul.f32 %v810, %v2167
    %v2184 = vmul.f32 %v816, %v2168
    %v2185 = vmul.f32 %v822, %v2169
    %v2186 = vmul.f32 %v828, %v2170
    %v2187 = vmul.f32 %v834, %v2171
    %v2188 = vmul.f32 %v840, %v2172
    %v2189 = vmul.f32 %v846, %v2173
    %v2190 = vmul.f32 %v852, %v2174
    %v2191 = vadd.f32 %v2143, %v2175
    %v2192 = vadd.f32 %v2144, %v2176
    %v2193 = vadd.f32 %v2145, %v2177
    %v2194 = vadd.f32 %v2146, %v2178
    %v2195 = vadd.f32 %v2147, %v2179
    %v2196 = vadd.f32 %v2148, %v2180
    %v2197 = vadd.f32 %v2149, %v2181
    %v2198 = vadd.f32 %v2150, %v2182
    %v2199 = vadd.f32 %v2151, %v2183
    %v2200 = vadd.f32 %v2152, %v2184
    %v2201 = vadd.f32 %v2153, %v2185
    %v2202 = vadd.f32 %v2154, %v2186
    %v2203 = vadd.f32 %v2155, %v2187
    %v2204 = vadd.f32 %v2156, %v2188
    %v2205 = vadd.f32 %v2157, %v2189
    %v2206 = vadd.f32 %v2158, %v2190
    %v2207 = vand.u32 2147483647, %v1408
    %v2208 = vand.u32 2147483647, %v1414
    %v2209 = vand.u32 2147483647, %v1420
    %v2210 = vand.u32 2147483647, %v1426
    %v2211 = vand.u32 2147483647, %v1432
    %v2212 = vand.u32 2147483647, %v1438
    %v2213 = vand.u32 2147483647, %v1444
    %v2214 = vand.u32 2147483647, %v1450
    %v2215 = vand.u32 2147483647, %v1456
    %v2216 = vand.u32 2147483647, %v1462
    %v2217 = vand.u32 2147483647, %v1468
    %v2218 = vand.u32 2147483647, %v1474
    %v2219 = vand.u32 2147483647, %v1480
    %v2220 = vand.u32 2147483647, %v1486
    %v2221 = vand.u32 2147483647, %v1492
    %v2222 = vand.u32 2147483647, %v1498
    %v2223 = vmul.f32 %v764, %v2207
    %v2224 = vmul.f32 %v770, %v2208
    %v2225 = vmul.f32 %v776, %v2209
    %v2226 = vmul.f32 %v782, %v2210
    %v2227 = vmul.f32 %v788, %v2211
    %v2228 = vmul.f32 %v794, %v2212
    %v2229 = vmul.f32 %v800, %v2213
    %v2230 = vmul.f32 %v806, %v2214
    %v2231 = vmul.f32 %v812, %v2215
    %v2232 = vmul.f32 %v818, %v2216
    %v2233 = vmul.f32 %v824, %v2217
    %v2234 = vmul.f32 %v830, %v2218
    %v2235 = vmul.f32 %v836, %v2219
    %v2236 = vmul.f32 %v842, %v2220
    %v2237 = vmul.f32 %v848, %v2221
    %v2238 = vmul.f32 %v854, %v2222
    %v2239 = vadd.f32 %v2191, %v2223
    %v2240 = vadd.f32 %v2192, %v2224
    %v2241 = vadd.f32 %v2193, %v2225
    %v2242 = vadd.f32 %v2194, %v2226
    %v2243 = vadd.f32 %v2195, %v2227
    %v2244 = vadd.f32 %v2196, %v2228
    %v2245 = vadd.f32 %v2197, %v2229
    %v2246 = vadd.f32 %v2198, %v2230
    %v2247 = vadd.f32 %v2199, %v2231
    %v2248 = vadd.f32 %v2200, %v2232
    %v2249 = vadd.f32 %v2201, %v2233
    %v2250 = vadd.f32 %v2202, %v2234
    %v2251 = vadd.f32 %v2203, %v2235
    %v2252 = vadd.f32 %v2204, %v2236
    %v2253 = vadd.f32 %v2205, %v2237
    %v2254 = vadd.f32 %v2206, %v2238
    %v2255 = vand.u32 2147483647, %v1567
    %v2256 = vand.u32 2147483647, %v1573
    %v2257 = vand.u32 2147483647, %v1579
    %v2258 = vand.u32 2147483647, %v1585
    %v2259 = vand.u32 2147483647, %v1591
    %v2260 = vand.u32 2147483647, %v1597
    %v2261 = vand.u32 2147483647, %v1603
    %v2262 = vand.u32 2147483647, %v1609
    %v2263 = vand.u32 2147483647, %v1615
    %v2264 = vand.u32 2147483647, %v1621
    %v2265 = vand.u32 2147483647, %v1627
    %v2266 = vand.u32 2147483647, %v1633
    %v2267 = vand.u32 2147483647, %v1639
    %v2268 = vand.u32 2147483647, %v1645
    %v2269 = vand.u32 2147483647, %v1651
    %v2270 = vand.u32 2147483647, %v1657
    %v2271 = vmul.f32 %v923, %v2255
    %v2272 = vmul.f32 %v929, %v2256
    %v2273 = vmul.f32 %v935, %v2257
    %v2274 = vmul.f32 %v941, %v2258
    %v2275 = vmul.f32 %v947, %v2259
    %v2276 = vmul.f32 %v953, %v2260
    %v2277 = vmul.f32 %v959, %v2261
    %v2278 = vmul.f32 %v965, %v2262
    %v2279 = vmul.f32 %v971, %v2263
    %v2280 = vmul.f32 %v977, %v2264
    %v2281 = vmul.f32 %v983, %v2265
    %v2282 = vmul.f32 %v989, %v2266
    %v2283 = vmul.f32 %v995, %v2267
    %v2284 = vmul.f32 %v1001, %v2268
    %v2285 = vmul.f32 %v1007, %v2269
    %v2286 = vmul.f32 %v1013, %v2270
    %v2287 = vadd.f32 %v2239, %v2271
    %v2288 = vadd.f32 %v2240, %v2272
    %v2289 = vadd.f32 %v2241, %v2273
    %v2290 = vadd.f32 %v2242, %v2274
    %v2291 = vadd.f32 %v2243, %v2275
    %v2292 = vadd.f32 %v2244, %v2276
    %v2293 = vadd.f32 %v2245, %v2277
    %v2294 = vadd.f32 %v2246, %v2278
    %v2295 = vadd.f32 %v2247, %v2279
    %v2296 = vadd.f32 %v2248, %v2280
    %v2297 = vadd.f32 %v2249, %v2281
    %v2298 = vadd.f32 %v2250, %v2282
    %v2299 = vadd.f32 %v2251, %v2283
    %v2300 = vadd.f32 %v2252, %v2284
    %v2301 = vadd.f32 %v2253, %v2285
    %v2302 = vadd.f32 %v2254, %v2286
    %v2303 = vand.u32 2147483647, %v1569
    %v2304 = vand.u32 2147483647, %v1575
    %v2305 = vand.u32 2147483647, %v1581
    %v2306 = vand.u32 2147483647, %v1587
    %v2307 = vand.u32 2147483647, %v1593
    %v2308 = vand.u32 2147483647, %v1599
    %v2309 = vand.u32 2147483647, %v1605
    %v2310 = vand.u32 2147483647, %v1611
    %v2311 = vand.u32 2147483647, %v1617
    %v2312 = vand.u32 2147483647, %v1623
    %v2313 = vand.u32 2147483647, %v1629
    %v2314 = vand.u32 2147483647, %v1635
    %v2315 = vand.u32 2147483647, %v1641
    %v2316 = vand.u32 2147483647, %v1647
    %v2317 = vand.u32 2147483647, %v1653
    %v2318 = vand.u32 2147483647, %v1659
    %v2319 = vmul.f32 %v925, %v2303
    %v2320 = vmul.f32 %v931, %v2304
    %v2321 = vmul.f32 %v937, %v2305
    %v2322 = vmul.f32 %v943, %v2306
    %v2323 = vmul.f32 %v949, %v2307
    %v2324 = vmul.f32 %v955, %v2308
    %v2325 = vmul.f32 %v961, %v2309
    %v2326 = vmul.f32 %v967, %v2310
    %v2327 = vmul.f32 %v973, %v2311
    %v2328 = vmul.f32 %v979, %v2312
    %v2329 = vmul.f32 %v985, %v2313
    %v2330 = vmul.f32 %v991, %v2314
    %v2331 = vmul.f32 %v997, %v2315
    %v2332 = vmul.f32 %v1003, %v2316
    %v2333 = vmul.f32 %v1009, %v2317
    %v2334 = vmul.f32 %v1015, %v2318
    %v2335 = vadd.f32 %v2287, %v2319
    %v2336 = vadd.f32 %v2288, %v2320
    %v2337 = vadd.f32 %v2289, %v2321
    %v2338 = vadd.f32 %v2290, %v2322
    %v2339 = vadd.f32 %v2291, %v2323
    %v2340 = vadd.f32 %v2292, %v2324
    %v2341 = vadd.f32 %v2293, %v2325
    %v2342 = vadd.f32 %v2294, %v2326
    %v2343 = vadd.f32 %v2295, %v2327
    %v2344 = vadd.f32 %v2296, %v2328
    %v2345 = vadd.f32 %v2297, %v2329
    %v2346 = vadd.f32 %v2298, %v2330
    %v2347 = vadd.f32 %v2299, %v2331
    %v2348 = vadd.f32 %v2300, %v2332
    %v2349 = vadd.f32 %v2301, %v2333
    %v2350 = vadd.f32 %v2302, %v2334
    %vm2351 = vcmp.gt.f32.partialorder %v2335, 0.0
    %vm2352 = vcmp.gt.f32.partialorder %v2336, 0.0
    %vm2353 = vcmp.gt.f32.partialorder %v2337, 0.0
    %vm2354 = vcmp.gt.f32.partialorder %v2338, 0.0
    %vm2355 = vcmp.gt.f32.partialorder %v2339, 0.0
    %vm2356 = vcmp.gt.f32.partialorder %v2340, 0.0
    %vm2357 = vcmp.gt.f32.partialorder %v2341, 0.0
    %vm2358 = vcmp.gt.f32.partialorder %v2342, 0.0
    %vm2359 = vcmp.gt.f32.partialorder %v2343, 0.0
    %vm2360 = vcmp.gt.f32.partialorder %v2344, 0.0
    %vm2361 = vcmp.gt.f32.partialorder %v2345, 0.0
    %vm2362 = vcmp.gt.f32.partialorder %v2346, 0.0
    %vm2363 = vcmp.gt.f32.partialorder %v2347, 0.0
    %vm2364 = vcmp.gt.f32.partialorder %v2348, 0.0
    %vm2365 = vcmp.gt.f32.partialorder %v2349, 0.0
    %vm2366 = vcmp.gt.f32.partialorder %v2350, 0.0
    %v2367 = vmin.f32 %v2335, 0.0
    %v2368 = vmin.f32 %v2336, 0.0
    %v2369 = vmin.f32 %v2337, 0.0
    %v2370 = vmin.f32 %v2338, 0.0
    %v2371 = vmin.f32 %v2339, 0.0
    %v2372 = vmin.f32 %v2340, 0.0
    %v2373 = vmin.f32 %v2341, 0.0
    %v2374 = vmin.f32 %v2342, 0.0
    %v2375 = vmin.f32 %v2343, 0.0
    %v2376 = vmin.f32 %v2344, 0.0
    %v2377 = vmin.f32 %v2345, 0.0
    %v2378 = vmin.f32 %v2346, 0.0
    %v2379 = vmin.f32 %v2347, 0.0
    %v2380 = vmin.f32 %v2348, 0.0
    %v2381 = vmin.f32 %v2349, 0.0
    %v2382 = vmin.f32 %v2350, 0.0
    %v2383 = vmul.f32 %v2367, 1.442695
    %v2384 = vpow.pop %v2383
    %v2385 = vmul.f32 %v2368, 1.442695
    %v2386 = vpow.pop %v2385
    %v2387 = vmul.f32 %v2369, 1.442695
    %v2388 = vpow.pop %v2387
    %v2389 = vmul.f32 %v2370, 1.442695
    %v2390 = vpow.pop %v2389
    %v2391 = vmul.f32 %v2371, 1.442695
    %v2392 = vpow.pop %v2391
    %v2393 = vmul.f32 %v2372, 1.442695
    %v2394 = vpow.pop %v2393
    %v2395 = vmul.f32 %v2373, 1.442695
    %v2396 = vpow.pop %v2395
    %v2397 = vmul.f32 %v2374, 1.442695
    %v2398 = vpow.pop %v2397
    %v2399 = vmul.f32 %v2375, 1.442695
    %v2400 = vpow.pop %v2399
    %v2401 = vmul.f32 %v2376, 1.442695
    %v2402 = vpow.pop %v2401
    %v2403 = vmul.f32 %v2377, 1.442695
    %v2404 = vpow.pop %v2403
    %v2405 = vmul.f32 %v2378, 1.442695
    %v2406 = vpow.pop %v2405
    %v2407 = vmul.f32 %v2379, 1.442695
    %v2408 = vpow.pop %v2407
    %v2409 = vmul.f32 %v2380, 1.442695
    %v2410 = vpow.pop %v2409
    %v2411 = vmul.f32 %v2381, 1.442695
    %v2412 = vpow.pop %v2411
    %v2413 = vmul.f32 %v2382, 1.442695
    %v2414 = vpow.pop %v2413
    %v2415 = vsub.f32 %v2384, 1.0
    %v2416 = vsub.f32 %v2386, 1.0
    %v2417 = vsub.f32 %v2388, 1.0
    %v2418 = vsub.f32 %v2390, 1.0
    %v2419 = vsub.f32 %v2392, 1.0
    %v2420 = vsub.f32 %v2394, 1.0
    %v2421 = vsub.f32 %v2396, 1.0
    %v2422 = vsub.f32 %v2398, 1.0
    %v2423 = vsub.f32 %v2400, 1.0
    %v2424 = vsub.f32 %v2402, 1.0
    %v2425 = vsub.f32 %v2404, 1.0
    %v2426 = vsub.f32 %v2406, 1.0
    %v2427 = vsub.f32 %v2408, 1.0
    %v2428 = vsub.f32 %v2410, 1.0
    %v2429 = vsub.f32 %v2412, 1.0
    %v2430 = vsub.f32 %v2414, 1.0
    %v2431 = vsel %vm2351, %v2335, %v2415
    %v2432 = vsel %vm2352, %v2336, %v2416
    %v2433 = vsel %vm2353, %v2337, %v2417
    %v2434 = vsel %vm2354, %v2338, %v2418
    %v2435 = vsel %vm2355, %v2339, %v2419
    %v2436 = vsel %vm2356, %v2340, %v2420
    %v2437 = vsel %vm2357, %v2341, %v2421
    %v2438 = vsel %vm2358, %v2342, %v2422
    %v2439 = vsel %vm2359, %v2343, %v2423
    %v2440 = vsel %vm2360, %v2344, %v2424
    %v2441 = vsel %vm2361, %v2345, %v2425
    %v2442 = vsel %vm2362, %v2346, %v2426
    %v2443 = vsel %vm2363, %v2347, %v2427
    %v2444 = vsel %vm2364, %v2348, %v2428
    %v2445 = vsel %vm2365, %v2349, %v2429
    %v2446 = vsel %vm2366, %v2350, %v2430
    %v2447 = vand.u32 2147483647, %v1730
    %v2448 = vand.u32 2147483647, %v1736
    %v2449 = vand.u32 2147483647, %v1742
    %v2450 = vand.u32 2147483647, %v1748
    %v2451 = vand.u32 2147483647, %v1754
    %v2452 = vand.u32 2147483647, %v1760
    %v2453 = vand.u32 2147483647, %v1766
    %v2454 = vand.u32 2147483647, %v1772
    %v2455 = vand.u32 2147483647, %v1778
    %v2456 = vand.u32 2147483647, %v1784
    %v2457 = vand.u32 2147483647, %v1790
    %v2458 = vand.u32 2147483647, %v1796
    %v2459 = vand.u32 2147483647, %v1802
    %v2460 = vand.u32 2147483647, %v1808
    %v2461 = vand.u32 2147483647, %v1814
    %v2462 = vand.u32 2147483647, %v1820
    %v2463 = vmax.f32 %v1889, 0.0
    %v2464 = vmax.f32 %v1894, 0.0
    %v2465 = vmax.f32 %v1899, 0.0
    %v2466 = vmax.f32 %v1904, 0.0
    %v2467 = vmax.f32 %v1909, 0.0
    %v2468 = vmax.f32 %v1914, 0.0
    %v2469 = vmax.f32 %v1919, 0.0
    %v2470 = vmax.f32 %v1924, 0.0
    %v2471 = vmax.f32 %v1929, 0.0
    %v2472 = vmax.f32 %v1934, 0.0
    %v2473 = vmax.f32 %v1939, 0.0
    %v2474 = vmax.f32 %v1944, 0.0
    %v2475 = vmax.f32 %v1949, 0.0
    %v2476 = vmax.f32 %v1954, 0.0
    %v2477 = vmax.f32 %v1959, 0.0
    %v2478 = vmax.f32 %v1964, 0.0
    %v2479 = vmul.f32 %v2431, %v2447
    %v2480 = vmul.f32 %v2432, %v2448
    %v2481 = vmul.f32 %v2433, %v2449
    %v2482 = vmul.f32 %v2434, %v2450
    %v2483 = vmul.f32 %v2435, %v2451
    %v2484 = vmul.f32 %v2436, %v2452
    %v2485 = vmul.f32 %v2437, %v2453
    %v2486 = vmul.f32 %v2438, %v2454
    %v2487 = vmul.f32 %v2439, %v2455
    %v2488 = vmul.f32 %v2440, %v2456
    %v2489 = vmul.f32 %v2441, %v2457
    %v2490 = vmul.f32 %v2442, %v2458
    %v2491 = vmul.f32 %v2443, %v2459
    %v2492 = vmul.f32 %v2444, %v2460
    %v2493 = vmul.f32 %v2445, %v2461
    %v2494 = vmul.f32 %v2446, %v2462
    %v2495 = vld [vmem:[#allocation6] sm:$0x1]
    %v2497 = vlaneseq
    %v2498 = vshrl.u32 %v2497, 7
    %v2499 = vsub.s32 0, %v2498
    %v2500 = vrot.slane %v2495, %v2499
    %v2502 = vmul.f32 %v2463, %v2500
    %v2503 = vmul.f32 %v2464, %v2500
    %v2504 = vmul.f32 %v2465, %v2500
    %v2505 = vmul.f32 %v2466, %v2500
    %v2506 = vmul.f32 %v2467, %v2500
    %v2507 = vmul.f32 %v2468, %v2500
    %v2508 = vmul.f32 %v2469, %v2500
    %v2509 = vmul.f32 %v2470, %v2500
    %v2510 = vmul.f32 %v2471, %v2500
    %v2511 = vmul.f32 %v2472, %v2500
    %v2512 = vmul.f32 %v2473, %v2500
    %v2513 = vmul.f32 %v2474, %v2500
    %v2514 = vmul.f32 %v2475, %v2500
    %v2515 = vmul.f32 %v2476, %v2500
    %v2516 = vmul.f32 %v2477, %v2500
    %v2517 = vmul.f32 %v2478, %v2500
    %v2518 = vadd.f32 %v2479, %v2502
    %v2519 = vadd.f32 %v2480, %v2503
    %v2520 = vadd.f32 %v2481, %v2504
    %v2521 = vadd.f32 %v2482, %v2505
    %v2522 = vadd.f32 %v2483, %v2506
    %v2523 = vadd.f32 %v2484, %v2507
    %v2524 = vadd.f32 %v2485, %v2508
    %v2525 = vadd.f32 %v2486, %v2509
    %v2526 = vadd.f32 %v2487, %v2510
    %v2527 = vadd.f32 %v2488, %v2511
    %v2528 = vadd.f32 %v2489, %v2512
    %v2529 = vadd.f32 %v2490, %v2513
    %v2530 = vadd.f32 %v2491, %v2514
    %v2531 = vadd.f32 %v2492, %v2515
    %v2532 = vadd.f32 %v2493, %v2516
    %v2533 = vadd.f32 %v2494, %v2517
    %2534 = vadd.xlane.f32.xlu0 %v2518
    %v2535 = vpop.xlane.xlu0 %2534
    %2536 = vadd.xlane.f32.xlu0 %v2519
    %v2537 = vpop.xlane.xlu0 %2536
    %2538 = vadd.xlane.f32.xlu0 %v2520
    %v2539 = vpop.xlane.xlu0 %2538
    %2540 = vadd.xlane.f32.xlu0 %v2521
    %v2541 = vpop.xlane.xlu0 %2540
    %2542 = vadd.xlane.f32.xlu0 %v2522
    %v2543 = vpop.xlane.xlu0 %2542
    %2544 = vadd.xlane.f32.xlu0 %v2523
    %v2545 = vpop.xlane.xlu0 %2544
    %2546 = vadd.xlane.f32.xlu0 %v2524
    %v2547 = vpop.xlane.xlu0 %2546
    %2548 = vadd.xlane.f32.xlu0 %v2525
    %v2549 = vpop.xlane.xlu0 %2548
    %2550 = vadd.xlane.f32.xlu0 %v2526
    %v2551 = vpop.xlane.xlu0 %2550
    %2552 = vadd.xlane.f32.xlu0 %v2527
    %v2553 = vpop.xlane.xlu0 %2552
    %2554 = vadd.xlane.f32.xlu0 %v2528
    %v2555 = vpop.xlane.xlu0 %2554
    %2556 = vadd.xlane.f32.xlu0 %v2529
    %v2557 = vpop.xlane.xlu0 %2556
    %2558 = vadd.xlane.f32.xlu0 %v2530
    %v2559 = vpop.xlane.xlu0 %2558
    %2560 = vadd.xlane.f32.xlu0 %v2531
    %v2561 = vpop.xlane.xlu0 %2560
    %2562 = vadd.xlane.f32.xlu0 %v2532
    %v2563 = vpop.xlane.xlu0 %2562
    %2564 = vadd.xlane.f32.xlu0 %v2533
    %v2565 = vpop.xlane.xlu0 %2564
    %vm2566 = vcmask 7168
    %2567 = vst.msk [vmem:[%s3] sm:$0xff] %vm2566, %v2535
    %2568 = vst.msk [vmem:[%s3 + $0x8] sm:$0xff] %vm2566, %v2537
    %2569 = vst.msk [vmem:[%s3 + $0x10] sm:$0xff] %vm2566, %v2539
    %2570 = vst.msk [vmem:[%s3 + $0x18] sm:$0xff] %vm2566, %v2541
    %2571 = vst.msk [vmem:[%s3 + $0x20] sm:$0xff] %vm2566, %v2543
    %2572 = vst.msk [vmem:[%s3 + $0x28] sm:$0xff] %vm2566, %v2545
    %2573 = vst.msk [vmem:[%s3 + $0x30] sm:$0xff] %vm2566, %v2547
    %2574 = vst.msk [vmem:[%s3 + $0x38] sm:$0xff] %vm2566, %v2549
    %2575 = vst.msk [vmem:[%s3 + $0x40] sm:$0xff] %vm2566, %v2551
    %2576 = vst.msk [vmem:[%s3 + $0x48] sm:$0xff] %vm2566, %v2553
    %2577 = vst.msk [vmem:[%s3 + $0x50] sm:$0xff] %vm2566, %v2555
    %2578 = vst.msk [vmem:[%s3 + $0x58] sm:$0xff] %vm2566, %v2557
    %2579 = vst.msk [vmem:[%s3 + $0x60] sm:$0xff] %vm2566, %v2559
    %2580 = vst.msk [vmem:[%s3 + $0x68] sm:$0xff] %vm2566, %v2561
    %2581 = vst.msk [vmem:[%s3 + $0x70] sm:$0xff] %vm2566, %v2563
    %2582 = vst.msk [vmem:[%s3 + $0x78] sm:$0xff] %vm2566, %v2565
    // Predicated region
    $region26: #{tpu_custom_call.1} parent=1 // pred_check
      _
    $region27: #{tpu_custom_call.1} parent=1 // pred_check_branch
      %2584 = sbr.rel (0) target = $region29
    $region28: #{tpu_custom_call.1} parent=1 // pred_region
      _
    $region29: #{tpu_custom_call.1} parent=1 // pred_fallthru
      _
    // Predicated region
    $region30: #{tpu_custom_call.1} parent=1 // pred_check
      _
    $region31: #{tpu_custom_call.1} parent=1 // pred_check_branch
      %2586 = sbr.rel (0) target = $region33
    $region32: #{tpu_custom_call.1} parent=1 // pred_region
      _
    $region33: #{tpu_custom_call.1} parent=1 // pred_fallthru
      _
    %2587 = vsyncpa [#allocation3], 1
    %2588 = vsyncpa [#allocation5], 1

</llo_original>
